<compile_context>
chip_gen: v7x
topology: tpu7x:2x2x1
jax: 0.10.0
libtpu: 0.0.40
codegen_flags: <defaults>
</compile_context>

<pallas_src>
import math

import jax
import jax.numpy as jnp
from jax.experimental import pallas as pl
from jax.experimental.pallas import tpu as pltpu


def _make_kernel(T, C_res, C_skip, dilations, pad):
    def kernel(x_ref,                       # (T, C_res) this batch element's signal
               wg_ref, bg_ref,              # fused gate weights (L,2C,2C) bf16 / bias (L,1,2C) f32
               wo_ref, bo_ref,              # fused res|skip weights (L,C,C+Cs) bf16 / bias (L,1,C+Cs) f32
               out_ref,                     # (T, C_skip) skip output
               state_ref):                  # VMEM scratch (pad+T, C_res): zero-left-padded residual signal
        # Initialize the causal zero pad and load the input signal (f32 residual stream).
        state_ref[pl.ds(0, pad), :] = jnp.zeros((pad, C_res), jnp.float32)
        state_ref[pl.ds(pad, T), :] = x_ref[...].astype(jnp.float32)

        skip_acc = jnp.zeros((T, C_skip), jnp.float32)

        for li, d in enumerate(dilations):              # static unroll, static offsets
            cur = state_ref[pl.ds(pad, T), :]           # x[t]
            prev = state_ref[pl.ds(pad - d, T), :]      # x[t-d] (zeros for t < d)

            # Fused gated dilated conv (k=2):  [prev|cur] @ [[w0f w0g],[w1f w1g]] + [bf|bg]
            xcat = jnp.concatenate([prev, cur], axis=-1).astype(jnp.bfloat16)
            gate = jnp.dot(xcat, wg_ref[li],
                           preferred_element_type=jnp.float32) + bg_ref[li]
            f = jnp.tanh(gate[:, :C_res])
            g = 0.5 * (jnp.tanh(0.5 * gate[:, C_res:]) + 1.0)   # sigmoid via single tanh
            z = (f * g).astype(jnp.bfloat16)

            # Fused residual + skip 1x1 convs:  z @ [rw|sw] + [rb|sb]
            zo = jnp.dot(z, wo_ref[li],
                         preferred_element_type=jnp.float32) + bo_ref[li]
            state_ref[pl.ds(pad, T), :] = cur + zo[:, :C_res]   # residual update (f32)
            skip_acc = skip_acc + zo[:, C_res:]                 # skip accumulation (f32)

        out_ref[...] = skip_acc.astype(out_ref.dtype)

    return kernel


def dilation_conv_layer(x_nct, dilations, packed_params):
    """x_nct: (B, C_res, T) float32 (PyTorch NCL). Returns (B, C_skip, T)."""
    w_gate, b_gate, w_out, b_out = packed_params
    B, C_res, T = x_nct.shape
    C_skip = w_out.shape[-1] - C_res
    L = len(dilations)
    d_max = max(dilations)
    pad = ((d_max + 7) // 8) * 8            # round causal pad up to a sublane multiple

    x_btc = jnp.transpose(x_nct, (0, 2, 1)).astype(jnp.float32)

    grid_spec = pltpu.PrefetchScalarGridSpec(
        num_scalar_prefetch=0,
        grid=(B,),                           # batch axis only; layers unrolled in-kernel
        in_specs=[
            pl.BlockSpec((None, T, C_res), lambda b: (b, 0, 0)),             # x
            pl.BlockSpec((L, 2 * C_res, 2 * C_res), lambda b: (0, 0, 0)),    # W_gate (bf16)
            pl.BlockSpec((L, 1, 2 * C_res), lambda b: (0, 0, 0)),            # b_gate (f32)
            pl.BlockSpec((L, C_res, C_res + C_skip), lambda b: (0, 0, 0)),   # W_out (bf16)
            pl.BlockSpec((L, 1, C_res + C_skip), lambda b: (0, 0, 0)),       # b_out (f32)
        ],
        out_specs=pl.BlockSpec((None, T, C_skip), lambda b: (b, 0, 0)),
        scratch_shapes=[pltpu.VMEM((pad + T, C_res), jnp.float32)],
    )

    out_btc = pl.pallas_call(
        _make_kernel(T, C_res, C_skip, tuple(dilations), pad),
        grid_spec=grid_spec,
        out_shape=jax.ShapeDtypeStruct((B, T, C_skip), jnp.float32),
        compiler_params=pltpu.CompilerParams(dimension_semantics=("parallel",)),
    )(x_btc, w_gate, b_gate, w_out, b_out)

    return jnp.transpose(out_btc, (0, 2, 1))


def init_params(key, C_res, C_skip, dilations):
    """Deterministic xavier-uniform init matching the PyTorch module's shapes."""
    L = len(dilations)
    gains = {'tanh': 5.0 / 3.0, 'relu': math.sqrt(2.0), 'linear': 1.0}

    def xavier(k, out_c, in_c, ksz, gain):
        fan_in, fan_out = in_c * ksz, out_c * ksz
        bound = gain * math.sqrt(6.0 / (fan_in + fan_out))
        return jax.random.uniform(k, (out_c, in_c, ksz), jnp.float32, -bound, bound)

    def bias_init(k, out_c, in_c, ksz):
        bound = 1.0 / math.sqrt(in_c * ksz)
        return jax.random.uniform(k, (out_c,), jnp.float32, -bound, bound)

    keys = jax.random.split(key, 6 * L)
    w0f, w0g, w1f, w1g, bf, bg = [], [], [], [], [], []
    rw, rb, sw, sb = [], [], [], []
    for li in range(L):
        k_dw, k_db, k_rw, k_rb, k_sw, k_sb = keys[6 * li:6 * li + 6]
        wd = xavier(k_dw, 2 * C_res, C_res, 2, gains['tanh'])     # dilated conv, k=2
        bd = bias_init(k_db, 2 * C_res, C_res, 2)
        wr = xavier(k_rw, C_res, C_res, 1, gains['linear'])       # residual 1x1
        br = bias_init(k_rb, C_res, C_res, 1)
        ws = xavier(k_sw, C_skip, C_res, 1, gains['relu'])        # skip 1x1
        bs = bias_init(k_sb, C_skip, C_res, 1)
        # re-layout as (C_in, C_out) matrices for the (T, C) kernel layout
        w0f.append(wd[:C_res, :, 0].T)      # tap at t-d -> f half
        w0g.append(wd[C_res:, :, 0].T)      # tap at t-d -> g half
        w1f.append(wd[:C_res, :, 1].T)      # tap at t   -> f half
        w1g.append(wd[C_res:, :, 1].T)      # tap at t   -> g half
        bf.append(bd[:C_res][None, :])
        bg.append(bd[C_res:][None, :])
        rw.append(wr[:, :, 0].T)
        rb.append(br[None, :])
        sw.append(ws[:, :, 0].T)
        sb.append(bs[None, :])
    stack = lambda xs: jnp.stack(xs, axis=0)
    return tuple(map(stack, (w0f, w0g, w1f, w1g, bf, bg, rw, rb, sw, sb)))


def pack_params(params):
    """Fuse per-layer weights into the blocks the kernel consumes (weights -> bf16)."""
    (w0f, w0g, w1f, w1g, bf, bg, rw, rb, sw, sb) = params
    top = jnp.concatenate([w0f, w0g], axis=-1)          # (L, C, 2C)  rows for x[t-d]
    bot = jnp.concatenate([w1f, w1g], axis=-1)          # (L, C, 2C)  rows for x[t]
    w_gate = jnp.concatenate([top, bot], axis=1)        # (L, 2C, 2C)
    b_gate = jnp.concatenate([bf, bg], axis=-1)         # (L, 1, 2C)
    w_out = jnp.concatenate([rw, sw], axis=-1)          # (L, C, C+Cs)
    b_out = jnp.concatenate([rb, sb], axis=-1)          # (L, 1, C+Cs)
    return (w_gate.astype(jnp.bfloat16), b_gate.astype(jnp.float32),
            w_out.astype(jnp.bfloat16), b_out.astype(jnp.float32))


def reference_btc(x_btc, dilations, packed_params):
    """Pure-JAX reference mirroring the kernel math (bf16 operands, f32 accumulation)."""
    w_gate, b_gate, w_out, b_out = packed_params
    state = x_btc.astype(jnp.float32)
    B, T, C = state.shape
    C_skip = w_out.shape[-1] - C
    out = jnp.zeros((B, T, C_skip), jnp.float32)
    for i, d in enumerate(dilations):
        prev = jnp.pad(state, ((0, 0), (d, 0), (0, 0)))[:, :T, :]   # causal shift by d
        xcat = jnp.concatenate([prev, state], axis=-1).astype(jnp.bfloat16)
        gate = jnp.einsum('btc,co->bto', xcat, w_gate[i],
                          preferred_element_type=jnp.float32) + b_gate[i]
        f = jnp.tanh(gate[..., :C])
        g = 0.5 * (jnp.tanh(0.5 * gate[..., C:]) + 1.0)
        z = (f * g).astype(jnp.bfloat16)
        zo = jnp.einsum('btc,co->bto', z, w_out[i],
                        preferred_element_type=jnp.float32) + b_out[i]
        state = state + zo[..., :C]
        out = out + zo[..., C:]
    return out


if __name__ == "__main__":
    B, C_res, C_skip, T = 2, 16, 32, 64
    nr_layers, stack_time = 3, 2
    dilations = [2 ** i for i in range(nr_layers)] * stack_time     # [1,2,4,1,2,4]

    key = jax.random.PRNGKey(0)
    k_p, k_x = jax.random.split(key)
    params = init_params(k_p, C_res, C_skip, dilations)
    packed = pack_params(params)
    x_nct = jax.random.normal(k_x, (B, C_res, T), jnp.float32)      # PyTorch NCL input

    out = dilation_conv_layer(x_nct, dilations, packed)
    out = jax.block_until_ready(out)

    ref = jnp.transpose(
        reference_btc(jnp.transpose(x_nct, (0, 2, 1)), dilations, packed), (0, 2, 1))
    assert out.shape == (B, C_skip, T)
    max_err = float(jnp.max(jnp.abs(out - ref)))
    assert jnp.allclose(out, ref, atol=5e-3, rtol=5e-3), max_err
    print("KERNEL_OK")
</pallas_src>

<mosaic_0001>
module attributes {stable_mosaic.version = 11 : i64} {
  func.func @kernel(%arg0: i32, %arg1: memref<1x64x16xf32, #tpu.memory_space<vmem>>, %arg2: memref<6x32x32xbf16, #tpu.memory_space<vmem>>, %arg3: memref<6x1x32xf32, #tpu.memory_space<vmem>>, %arg4: memref<6x16x48xbf16, #tpu.memory_space<vmem>>, %arg5: memref<6x1x48xf32, #tpu.memory_space<vmem>>, %arg6: memref<1x64x32xf32, #tpu.memory_space<vmem>>, %arg7: memref<72x16xf32, #tpu.memory_space<vmem>>) attributes {dimension_semantics = [#tpu.dimension_semantics<parallel>], iteration_bounds = array<i64: 2>, scalar_prefetch = 0 : i64, scratch_operands = 1 : i64, tpu.core_type = #tpu.core_type<tc>, window_params = [{transform_indices = @transform_0, window_bounds = array<i64: 1, 64, 16>}, {pipeline_mode = #tpu.pipeline_mode<synchronous>, transform_indices = @transform_1, window_bounds = array<i64: 6, 32, 32>}, {pipeline_mode = #tpu.pipeline_mode<synchronous>, transform_indices = @transform_2, window_bounds = array<i64: 6, 1, 32>}, {pipeline_mode = #tpu.pipeline_mode<synchronous>, transform_indices = @transform_3, window_bounds = array<i64: 6, 16, 48>}, {pipeline_mode = #tpu.pipeline_mode<synchronous>, transform_indices = @transform_4, window_bounds = array<i64: 6, 1, 48>}, {transform_indices = @transform_5, window_bounds = array<i64: 1, 64, 32>}]} {
    %cst = arith.constant 0.000000e+00 : f32
    %0 = vector.broadcast %cst : f32 to vector<8x16xf32>
    %c0 = arith.constant 0 : index
    %c0_0 = arith.constant 0 : index
    %1 = vector.load %arg7[%c0, %c0_0] : memref<72x16xf32, #tpu.memory_space<vmem>>, vector<8x16xf32>
    tpu.vector_store %arg7[%c0, %c0_0], %0 {strides = array<i32>} : memref<72x16xf32, #tpu.memory_space<vmem>>, vector<8x16xf32>,
    %c0_1 = arith.constant 0 : index
    %c0_2 = arith.constant 0 : index
    %c0_3 = arith.constant 0 : index
    %2 = vector.load %arg1[%c0_1, %c0_2, %c0_3] : memref<1x64x16xf32, #tpu.memory_space<vmem>>, vector<1x64x16xf32>
    %3 = vector.shape_cast %2 : vector<1x64x16xf32> to vector<64x16xf32>
    %c8 = arith.constant 8 : index
    %c0_4 = arith.constant 0 : index
    %4 = vector.load %arg7[%c8, %c0_4] : memref<72x16xf32, #tpu.memory_space<vmem>>, vector<64x16xf32>
    tpu.vector_store %arg7[%c8, %c0_4], %3 {strides = array<i32>} : memref<72x16xf32, #tpu.memory_space<vmem>>, vector<64x16xf32>,
    %cst_5 = arith.constant 0.000000e+00 : f32
    %5 = vector.broadcast %cst_5 : f32 to vector<64x32xf32>
    %c8_6 = arith.constant 8 : index
    %c0_7 = arith.constant 0 : index
    %6 = vector.load %arg7[%c8_6, %c0_7] : memref<72x16xf32, #tpu.memory_space<vmem>>, vector<64x16xf32>
    %c7 = arith.constant 7 : index
    %c0_8 = arith.constant 0 : index
    %7 = vector.load %arg7[%c7, %c0_8] : memref<72x16xf32, #tpu.memory_space<vmem>>, vector<64x16xf32>
    %8 = tpu.concatenate %7, %6 in 1 : vector<64x16xf32>, vector<64x16xf32> -> vector<64x32xf32>
    %9 = arith.truncf %8 : vector<64x32xf32> to vector<64x32xbf16>
    %c0_9 = arith.constant 0 : index
    %c0_10 = arith.constant 0 : index
    %c0_11 = arith.constant 0 : index
    %10 = vector.load %arg2[%c0_9, %c0_10, %c0_11] : memref<6x32x32xbf16, #tpu.memory_space<vmem>>, vector<1x32x32xbf16>
    %11 = vector.shape_cast %10 : vector<1x32x32xbf16> to vector<32x32xbf16>
    %cst_12 = arith.constant dense<0.000000e+00> : vector<64x32xf32>
    %12 = tpu.matmul %9, %11, %cst_12 {dimension_numbers = #tpu.dot_dimension_numbers<[1], [0], [0], [1], [0, 0, 1, 1], [], []>} : vector<64x32xbf16>, vector<32x32xbf16>, vector<64x32xf32> -> vector<64x32xf32>
    %c0_13 = arith.constant 0 : index
    %c0_14 = arith.constant 0 : index
    %c0_15 = arith.constant 0 : index
    %13 = vector.load %arg3[%c0_13, %c0_14, %c0_15] : memref<6x1x32xf32, #tpu.memory_space<vmem>>, vector<1x1x32xf32>
    %14 = vector.shape_cast %13 : vector<1x1x32xf32> to vector<1x32xf32>
    %15 = vector.broadcast %14 : vector<1x32xf32> to vector<64x32xf32>
    %16 = arith.addf %12, %15 : vector<64x32xf32>
    %17 = vector.extract_strided_slice %16 {offsets = [0, 0], sizes = [64, 16], strides = [1, 1]} : vector<64x32xf32> to vector<64x16xf32>
    %18 = math.tanh %17 : vector<64x16xf32>
    %19 = vector.extract_strided_slice %16 {offsets = [0, 16], sizes = [64, 16], strides = [1, 1]} : vector<64x32xf32> to vector<64x16xf32>
    %cst_16 = arith.constant 5.000000e-01 : f32
    %20 = vector.broadcast %cst_16 : f32 to vector<64x16xf32>
    %21 = arith.mulf %20, %19 : vector<64x16xf32>
    %22 = math.tanh %21 : vector<64x16xf32>
    %cst_17 = arith.constant 1.000000e+00 : f32
    %23 = vector.broadcast %cst_17 : f32 to vector<64x16xf32>
    %24 = arith.addf %22, %23 : vector<64x16xf32>
    %cst_18 = arith.constant 5.000000e-01 : f32
    %25 = vector.broadcast %cst_18 : f32 to vector<64x16xf32>
    %26 = arith.mulf %25, %24 : vector<64x16xf32>
    %27 = arith.mulf %18, %26 : vector<64x16xf32>
    %28 = arith.truncf %27 : vector<64x16xf32> to vector<64x16xbf16>
    %c0_19 = arith.constant 0 : index
    %c0_20 = arith.constant 0 : index
    %c0_21 = arith.constant 0 : index
    %29 = vector.load %arg4[%c0_19, %c0_20, %c0_21] : memref<6x16x48xbf16, #tpu.memory_space<vmem>>, vector<1x16x48xbf16>
    %30 = vector.shape_cast %29 : vector<1x16x48xbf16> to vector<16x48xbf16>
    %cst_22 = arith.constant dense<0.000000e+00> : vector<64x48xf32>
    %31 = tpu.matmul %28, %30, %cst_22 {dimension_numbers = #tpu.dot_dimension_numbers<[1], [0], [0], [1], [0, 0, 1, 1], [], []>} : vector<64x16xbf16>, vector<16x48xbf16>, vector<64x48xf32> -> vector<64x48xf32>
    %c0_23 = arith.constant 0 : index
    %c0_24 = arith.constant 0 : index
    %c0_25 = arith.constant 0 : index
    %32 = vector.load %arg5[%c0_23, %c0_24, %c0_25] : memref<6x1x48xf32, #tpu.memory_space<vmem>>, vector<1x1x48xf32>
    %33 = vector.shape_cast %32 : vector<1x1x48xf32> to vector<1x48xf32>
    %34 = vector.broadcast %33 : vector<1x48xf32> to vector<64x48xf32>
    %35 = arith.addf %31, %34 : vector<64x48xf32>
    %36 = vector.extract_strided_slice %35 {offsets = [0, 0], sizes = [64, 16], strides = [1, 1]} : vector<64x48xf32> to vector<64x16xf32>
    %37 = arith.addf %6, %36 : vector<64x16xf32>
    %c8_26 = arith.constant 8 : index
    %c0_27 = arith.constant 0 : index
    %38 = vector.load %arg7[%c8_26, %c0_27] : memref<72x16xf32, #tpu.memory_space<vmem>>, vector<64x16xf32>
    tpu.vector_store %arg7[%c8_26, %c0_27], %37 {strides = array<i32>} : memref<72x16xf32, #tpu.memory_space<vmem>>, vector<64x16xf32>,
    %39 = vector.extract_strided_slice %35 {offsets = [0, 16], sizes = [64, 32], strides = [1, 1]} : vector<64x48xf32> to vector<64x32xf32>
    %40 = arith.addf %5, %39 : vector<64x32xf32>
    %c8_28 = arith.constant 8 : index
    %c0_29 = arith.constant 0 : index
    %41 = vector.load %arg7[%c8_28, %c0_29] : memref<72x16xf32, #tpu.memory_space<vmem>>, vector<64x16xf32>
    %c6 = arith.constant 6 : index
    %c0_30 = arith.constant 0 : index
    %42 = vector.load %arg7[%c6, %c0_30] : memref<72x16xf32, #tpu.memory_space<vmem>>, vector<64x16xf32>
    %43 = tpu.concatenate %42, %41 in 1 : vector<64x16xf32>, vector<64x16xf32> -> vector<64x32xf32>
    %44 = arith.truncf %43 : vector<64x32xf32> to vector<64x32xbf16>
    %c1 = arith.constant 1 : index
    %c0_31 = arith.constant 0 : index
    %c0_32 = arith.constant 0 : index
    %45 = vector.load %arg2[%c1, %c0_31, %c0_32] : memref<6x32x32xbf16, #tpu.memory_space<vmem>>, vector<1x32x32xbf16>
    %46 = vector.shape_cast %45 : vector<1x32x32xbf16> to vector<32x32xbf16>
    %cst_33 = arith.constant dense<0.000000e+00> : vector<64x32xf32>
    %47 = tpu.matmul %44, %46, %cst_33 {dimension_numbers = #tpu.dot_dimension_numbers<[1], [0], [0], [1], [0, 0, 1, 1], [], []>} : vector<64x32xbf16>, vector<32x32xbf16>, vector<64x32xf32> -> vector<64x32xf32>
    %c1_34 = arith.constant 1 : index
    %c0_35 = arith.constant 0 : index
    %c0_36 = arith.constant 0 : index
    %48 = vector.load %arg3[%c1_34, %c0_35, %c0_36] : memref<6x1x32xf32, #tpu.memory_space<vmem>>, vector<1x1x32xf32>
    %49 = vector.shape_cast %48 : vector<1x1x32xf32> to vector<1x32xf32>
    %50 = vector.broadcast %49 : vector<1x32xf32> to vector<64x32xf32>
    %51 = arith.addf %47, %50 : vector<64x32xf32>
    %52 = vector.extract_strided_slice %51 {offsets = [0, 0], sizes = [64, 16], strides = [1, 1]} : vector<64x32xf32> to vector<64x16xf32>
    %53 = math.tanh %52 : vector<64x16xf32>
    %54 = vector.extract_strided_slice %51 {offsets = [0, 16], sizes = [64, 16], strides = [1, 1]} : vector<64x32xf32> to vector<64x16xf32>
    %cst_37 = arith.constant 5.000000e-01 : f32
    %55 = vector.broadcast %cst_37 : f32 to vector<64x16xf32>
    %56 = arith.mulf %55, %54 : vector<64x16xf32>
    %57 = math.tanh %56 : vector<64x16xf32>
    %cst_38 = arith.constant 1.000000e+00 : f32
    %58 = vector.broadcast %cst_38 : f32 to vector<64x16xf32>
    %59 = arith.addf %57, %58 : vector<64x16xf32>
    %cst_39 = arith.constant 5.000000e-01 : f32
    %60 = vector.broadcast %cst_39 : f32 to vector<64x16xf32>
    %61 = arith.mulf %60, %59 : vector<64x16xf32>
    %62 = arith.mulf %53, %61 : vector<64x16xf32>
    %63 = arith.truncf %62 : vector<64x16xf32> to vector<64x16xbf16>
    %c1_40 = arith.constant 1 : index
    %c0_41 = arith.constant 0 : index
    %c0_42 = arith.constant 0 : index
    %64 = vector.load %arg4[%c1_40, %c0_41, %c0_42] : memref<6x16x48xbf16, #tpu.memory_space<vmem>>, vector<1x16x48xbf16>
    %65 = vector.shape_cast %64 : vector<1x16x48xbf16> to vector<16x48xbf16>
    %cst_43 = arith.constant dense<0.000000e+00> : vector<64x48xf32>
    %66 = tpu.matmul %63, %65, %cst_43 {dimension_numbers = #tpu.dot_dimension_numbers<[1], [0], [0], [1], [0, 0, 1, 1], [], []>} : vector<64x16xbf16>, vector<16x48xbf16>, vector<64x48xf32> -> vector<64x48xf32>
    %c1_44 = arith.constant 1 : index
    %c0_45 = arith.constant 0 : index
    %c0_46 = arith.constant 0 : index
    %67 = vector.load %arg5[%c1_44, %c0_45, %c0_46] : memref<6x1x48xf32, #tpu.memory_space<vmem>>, vector<1x1x48xf32>
    %68 = vector.shape_cast %67 : vector<1x1x48xf32> to vector<1x48xf32>
    %69 = vector.broadcast %68 : vector<1x48xf32> to vector<64x48xf32>
    %70 = arith.addf %66, %69 : vector<64x48xf32>
    %71 = vector.extract_strided_slice %70 {offsets = [0, 0], sizes = [64, 16], strides = [1, 1]} : vector<64x48xf32> to vector<64x16xf32>
    %72 = arith.addf %41, %71 : vector<64x16xf32>
    %c8_47 = arith.constant 8 : index
    %c0_48 = arith.constant 0 : index
    %73 = vector.load %arg7[%c8_47, %c0_48] : memref<72x16xf32, #tpu.memory_space<vmem>>, vector<64x16xf32>
    tpu.vector_store %arg7[%c8_47, %c0_48], %72 {strides = array<i32>} : memref<72x16xf32, #tpu.memory_space<vmem>>, vector<64x16xf32>,
    %74 = vector.extract_strided_slice %70 {offsets = [0, 16], sizes = [64, 32], strides = [1, 1]} : vector<64x48xf32> to vector<64x32xf32>
    %75 = arith.addf %40, %74 : vector<64x32xf32>
    %c8_49 = arith.constant 8 : index
    %c0_50 = arith.constant 0 : index
    %76 = vector.load %arg7[%c8_49, %c0_50] : memref<72x16xf32, #tpu.memory_space<vmem>>, vector<64x16xf32>
    %c4 = arith.constant 4 : index
    %c0_51 = arith.constant 0 : index
    %77 = vector.load %arg7[%c4, %c0_51] : memref<72x16xf32, #tpu.memory_space<vmem>>, vector<64x16xf32>
    %78 = tpu.concatenate %77, %76 in 1 : vector<64x16xf32>, vector<64x16xf32> -> vector<64x32xf32>
    %79 = arith.truncf %78 : vector<64x32xf32> to vector<64x32xbf16>
    %c2 = arith.constant 2 : index
    %c0_52 = arith.constant 0 : index
    %c0_53 = arith.constant 0 : index
    %80 = vector.load %arg2[%c2, %c0_52, %c0_53] : memref<6x32x32xbf16, #tpu.memory_space<vmem>>, vector<1x32x32xbf16>
    %81 = vector.shape_cast %80 : vector<1x32x32xbf16> to vector<32x32xbf16>
    %cst_54 = arith.constant dense<0.000000e+00> : vector<64x32xf32>
    %82 = tpu.matmul %79, %81, %cst_54 {dimension_numbers = #tpu.dot_dimension_numbers<[1], [0], [0], [1], [0, 0, 1, 1], [], []>} : vector<64x32xbf16>, vector<32x32xbf16>, vector<64x32xf32> -> vector<64x32xf32>
    %c2_55 = arith.constant 2 : index
    %c0_56 = arith.constant 0 : index
    %c0_57 = arith.constant 0 : index
    %83 = vector.load %arg3[%c2_55, %c0_56, %c0_57] : memref<6x1x32xf32, #tpu.memory_space<vmem>>, vector<1x1x32xf32>
    %84 = vector.shape_cast %83 : vector<1x1x32xf32> to vector<1x32xf32>
    %85 = vector.broadcast %84 : vector<1x32xf32> to vector<64x32xf32>
    %86 = arith.addf %82, %85 : vector<64x32xf32>
    %87 = vector.extract_strided_slice %86 {offsets = [0, 0], sizes = [64, 16], strides = [1, 1]} : vector<64x32xf32> to vector<64x16xf32>
    %88 = math.tanh %87 : vector<64x16xf32>
    %89 = vector.extract_strided_slice %86 {offsets = [0, 16], sizes = [64, 16], strides = [1, 1]} : vector<64x32xf32> to vector<64x16xf32>
    %cst_58 = arith.constant 5.000000e-01 : f32
    %90 = vector.broadcast %cst_58 : f32 to vector<64x16xf32>
    %91 = arith.mulf %90, %89 : vector<64x16xf32>
    %92 = math.tanh %91 : vector<64x16xf32>
    %cst_59 = arith.constant 1.000000e+00 : f32
    %93 = vector.broadcast %cst_59 : f32 to vector<64x16xf32>
    %94 = arith.addf %92, %93 : vector<64x16xf32>
    %cst_60 = arith.constant 5.000000e-01 : f32
    %95 = vector.broadcast %cst_60 : f32 to vector<64x16xf32>
    %96 = arith.mulf %95, %94 : vector<64x16xf32>
    %97 = arith.mulf %88, %96 : vector<64x16xf32>
    %98 = arith.truncf %97 : vector<64x16xf32> to vector<64x16xbf16>
    %c2_61 = arith.constant 2 : index
    %c0_62 = arith.constant 0 : index
    %c0_63 = arith.constant 0 : index
    %99 = vector.load %arg4[%c2_61, %c0_62, %c0_63] : memref<6x16x48xbf16, #tpu.memory_space<vmem>>, vector<1x16x48xbf16>
    %100 = vector.shape_cast %99 : vector<1x16x48xbf16> to vector<16x48xbf16>
    %cst_64 = arith.constant dense<0.000000e+00> : vector<64x48xf32>
    %101 = tpu.matmul %98, %100, %cst_64 {dimension_numbers = #tpu.dot_dimension_numbers<[1], [0], [0], [1], [0, 0, 1, 1], [], []>} : vector<64x16xbf16>, vector<16x48xbf16>, vector<64x48xf32> -> vector<64x48xf32>
    %c2_65 = arith.constant 2 : index
    %c0_66 = arith.constant 0 : index
    %c0_67 = arith.constant 0 : index
    %102 = vector.load %arg5[%c2_65, %c0_66, %c0_67] : memref<6x1x48xf32, #tpu.memory_space<vmem>>, vector<1x1x48xf32>
    %103 = vector.shape_cast %102 : vector<1x1x48xf32> to vector<1x48xf32>
    %104 = vector.broadcast %103 : vector<1x48xf32> to vector<64x48xf32>
    %105 = arith.addf %101, %104 : vector<64x48xf32>
    %106 = vector.extract_strided_slice %105 {offsets = [0, 0], sizes = [64, 16], strides = [1, 1]} : vector<64x48xf32> to vector<64x16xf32>
    %107 = arith.addf %76, %106 : vector<64x16xf32>
    %c8_68 = arith.constant 8 : index
    %c0_69 = arith.constant 0 : index
    %108 = vector.load %arg7[%c8_68, %c0_69] : memref<72x16xf32, #tpu.memory_space<vmem>>, vector<64x16xf32>
    tpu.vector_store %arg7[%c8_68, %c0_69], %107 {strides = array<i32>} : memref<72x16xf32, #tpu.memory_space<vmem>>, vector<64x16xf32>,
    %109 = vector.extract_strided_slice %105 {offsets = [0, 16], sizes = [64, 32], strides = [1, 1]} : vector<64x48xf32> to vector<64x32xf32>
    %110 = arith.addf %75, %109 : vector<64x32xf32>
    %c8_70 = arith.constant 8 : index
    %c0_71 = arith.constant 0 : index
    %111 = vector.load %arg7[%c8_70, %c0_71] : memref<72x16xf32, #tpu.memory_space<vmem>>, vector<64x16xf32>
    %c7_72 = arith.constant 7 : index
    %c0_73 = arith.constant 0 : index
    %112 = vector.load %arg7[%c7_72, %c0_73] : memref<72x16xf32, #tpu.memory_space<vmem>>, vector<64x16xf32>
    %113 = tpu.concatenate %112, %111 in 1 : vector<64x16xf32>, vector<64x16xf32> -> vector<64x32xf32>
    %114 = arith.truncf %113 : vector<64x32xf32> to vector<64x32xbf16>
    %c3 = arith.constant 3 : index
    %c0_74 = arith.constant 0 : index
    %c0_75 = arith.constant 0 : index
    %115 = vector.load %arg2[%c3, %c0_74, %c0_75] : memref<6x32x32xbf16, #tpu.memory_space<vmem>>, vector<1x32x32xbf16>
    %116 = vector.shape_cast %115 : vector<1x32x32xbf16> to vector<32x32xbf16>
    %cst_76 = arith.constant dense<0.000000e+00> : vector<64x32xf32>
    %117 = tpu.matmul %114, %116, %cst_76 {dimension_numbers = #tpu.dot_dimension_numbers<[1], [0], [0], [1], [0, 0, 1, 1], [], []>} : vector<64x32xbf16>, vector<32x32xbf16>, vector<64x32xf32> -> vector<64x32xf32>
    %c3_77 = arith.constant 3 : index
    %c0_78 = arith.constant 0 : index
    %c0_79 = arith.constant 0 : index
    %118 = vector.load %arg3[%c3_77, %c0_78, %c0_79] : memref<6x1x32xf32, #tpu.memory_space<vmem>>, vector<1x1x32xf32>
    %119 = vector.shape_cast %118 : vector<1x1x32xf32> to vector<1x32xf32>
    %120 = vector.broadcast %119 : vector<1x32xf32> to vector<64x32xf32>
    %121 = arith.addf %117, %120 : vector<64x32xf32>
    %122 = vector.extract_strided_slice %121 {offsets = [0, 0], sizes = [64, 16], strides = [1, 1]} : vector<64x32xf32> to vector<64x16xf32>
    %123 = math.tanh %122 : vector<64x16xf32>
    %124 = vector.extract_strided_slice %121 {offsets = [0, 16], sizes = [64, 16], strides = [1, 1]} : vector<64x32xf32> to vector<64x16xf32>
    %cst_80 = arith.constant 5.000000e-01 : f32
    %125 = vector.broadcast %cst_80 : f32 to vector<64x16xf32>
    %126 = arith.mulf %125, %124 : vector<64x16xf32>
    %127 = math.tanh %126 : vector<64x16xf32>
    %cst_81 = arith.constant 1.000000e+00 : f32
    %128 = vector.broadcast %cst_81 : f32 to vector<64x16xf32>
    %129 = arith.addf %127, %128 : vector<64x16xf32>
    %cst_82 = arith.constant 5.000000e-01 : f32
    %130 = vector.broadcast %cst_82 : f32 to vector<64x16xf32>
    %131 = arith.mulf %130, %129 : vector<64x16xf32>
    %132 = arith.mulf %123, %131 : vector<64x16xf32>
    %133 = arith.truncf %132 : vector<64x16xf32> to vector<64x16xbf16>
    %c3_83 = arith.constant 3 : index
    %c0_84 = arith.constant 0 : index
    %c0_85 = arith.constant 0 : index
    %134 = vector.load %arg4[%c3_83, %c0_84, %c0_85] : memref<6x16x48xbf16, #tpu.memory_space<vmem>>, vector<1x16x48xbf16>
    %135 = vector.shape_cast %134 : vector<1x16x48xbf16> to vector<16x48xbf16>
    %cst_86 = arith.constant dense<0.000000e+00> : vector<64x48xf32>
    %136 = tpu.matmul %133, %135, %cst_86 {dimension_numbers = #tpu.dot_dimension_numbers<[1], [0], [0], [1], [0, 0, 1, 1], [], []>} : vector<64x16xbf16>, vector<16x48xbf16>, vector<64x48xf32> -> vector<64x48xf32>
    %c3_87 = arith.constant 3 : index
    %c0_88 = arith.constant 0 : index
    %c0_89 = arith.constant 0 : index
    %137 = vector.load %arg5[%c3_87, %c0_88, %c0_89] : memref<6x1x48xf32, #tpu.memory_space<vmem>>, vector<1x1x48xf32>
    %138 = vector.shape_cast %137 : vector<1x1x48xf32> to vector<1x48xf32>
    %139 = vector.broadcast %138 : vector<1x48xf32> to vector<64x48xf32>
    %140 = arith.addf %136, %139 : vector<64x48xf32>
    %141 = vector.extract_strided_slice %140 {offsets = [0, 0], sizes = [64, 16], strides = [1, 1]} : vector<64x48xf32> to vector<64x16xf32>
    %142 = arith.addf %111, %141 : vector<64x16xf32>
    %c8_90 = arith.constant 8 : index
    %c0_91 = arith.constant 0 : index
    %143 = vector.load %arg7[%c8_90, %c0_91] : memref<72x16xf32, #tpu.memory_space<vmem>>, vector<64x16xf32>
    tpu.vector_store %arg7[%c8_90, %c0_91], %142 {strides = array<i32>} : memref<72x16xf32, #tpu.memory_space<vmem>>, vector<64x16xf32>,
    %144 = vector.extract_strided_slice %140 {offsets = [0, 16], sizes = [64, 32], strides = [1, 1]} : vector<64x48xf32> to vector<64x32xf32>
    %145 = arith.addf %110, %144 : vector<64x32xf32>
    %c8_92 = arith.constant 8 : index
    %c0_93 = arith.constant 0 : index
    %146 = vector.load %arg7[%c8_92, %c0_93] : memref<72x16xf32, #tpu.memory_space<vmem>>, vector<64x16xf32>
    %c6_94 = arith.constant 6 : index
    %c0_95 = arith.constant 0 : index
    %147 = vector.load %arg7[%c6_94, %c0_95] : memref<72x16xf32, #tpu.memory_space<vmem>>, vector<64x16xf32>
    %148 = tpu.concatenate %147, %146 in 1 : vector<64x16xf32>, vector<64x16xf32> -> vector<64x32xf32>
    %149 = arith.truncf %148 : vector<64x32xf32> to vector<64x32xbf16>
    %c4_96 = arith.constant 4 : index
    %c0_97 = arith.constant 0 : index
    %c0_98 = arith.constant 0 : index
    %150 = vector.load %arg2[%c4_96, %c0_97, %c0_98] : memref<6x32x32xbf16, #tpu.memory_space<vmem>>, vector<1x32x32xbf16>
    %151 = vector.shape_cast %150 : vector<1x32x32xbf16> to vector<32x32xbf16>
    %cst_99 = arith.constant dense<0.000000e+00> : vector<64x32xf32>
    %152 = tpu.matmul %149, %151, %cst_99 {dimension_numbers = #tpu.dot_dimension_numbers<[1], [0], [0], [1], [0, 0, 1, 1], [], []>} : vector<64x32xbf16>, vector<32x32xbf16>, vector<64x32xf32> -> vector<64x32xf32>
    %c4_100 = arith.constant 4 : index
    %c0_101 = arith.constant 0 : index
    %c0_102 = arith.constant 0 : index
    %153 = vector.load %arg3[%c4_100, %c0_101, %c0_102] : memref<6x1x32xf32, #tpu.memory_space<vmem>>, vector<1x1x32xf32>
    %154 = vector.shape_cast %153 : vector<1x1x32xf32> to vector<1x32xf32>
    %155 = vector.broadcast %154 : vector<1x32xf32> to vector<64x32xf32>
    %156 = arith.addf %152, %155 : vector<64x32xf32>
    %157 = vector.extract_strided_slice %156 {offsets = [0, 0], sizes = [64, 16], strides = [1, 1]} : vector<64x32xf32> to vector<64x16xf32>
    %158 = math.tanh %157 : vector<64x16xf32>
    %159 = vector.extract_strided_slice %156 {offsets = [0, 16], sizes = [64, 16], strides = [1, 1]} : vector<64x32xf32> to vector<64x16xf32>
    %cst_103 = arith.constant 5.000000e-01 : f32
    %160 = vector.broadcast %cst_103 : f32 to vector<64x16xf32>
    %161 = arith.mulf %160, %159 : vector<64x16xf32>
    %162 = math.tanh %161 : vector<64x16xf32>
    %cst_104 = arith.constant 1.000000e+00 : f32
    %163 = vector.broadcast %cst_104 : f32 to vector<64x16xf32>
    %164 = arith.addf %162, %163 : vector<64x16xf32>
    %cst_105 = arith.constant 5.000000e-01 : f32
    %165 = vector.broadcast %cst_105 : f32 to vector<64x16xf32>
    %166 = arith.mulf %165, %164 : vector<64x16xf32>
    %167 = arith.mulf %158, %166 : vector<64x16xf32>
    %168 = arith.truncf %167 : vector<64x16xf32> to vector<64x16xbf16>
    %c4_106 = arith.constant 4 : index
    %c0_107 = arith.constant 0 : index
    %c0_108 = arith.constant 0 : index
    %169 = vector.load %arg4[%c4_106, %c0_107, %c0_108] : memref<6x16x48xbf16, #tpu.memory_space<vmem>>, vector<1x16x48xbf16>
    %170 = vector.shape_cast %169 : vector<1x16x48xbf16> to vector<16x48xbf16>
    %cst_109 = arith.constant dense<0.000000e+00> : vector<64x48xf32>
    %171 = tpu.matmul %168, %170, %cst_109 {dimension_numbers = #tpu.dot_dimension_numbers<[1], [0], [0], [1], [0, 0, 1, 1], [], []>} : vector<64x16xbf16>, vector<16x48xbf16>, vector<64x48xf32> -> vector<64x48xf32>
    %c4_110 = arith.constant 4 : index
    %c0_111 = arith.constant 0 : index
    %c0_112 = arith.constant 0 : index
    %172 = vector.load %arg5[%c4_110, %c0_111, %c0_112] : memref<6x1x48xf32, #tpu.memory_space<vmem>>, vector<1x1x48xf32>
    %173 = vector.shape_cast %172 : vector<1x1x48xf32> to vector<1x48xf32>
    %174 = vector.broadcast %173 : vector<1x48xf32> to vector<64x48xf32>
    %175 = arith.addf %171, %174 : vector<64x48xf32>
    %176 = vector.extract_strided_slice %175 {offsets = [0, 0], sizes = [64, 16], strides = [1, 1]} : vector<64x48xf32> to vector<64x16xf32>
    %177 = arith.addf %146, %176 : vector<64x16xf32>
    %c8_113 = arith.constant 8 : index
    %c0_114 = arith.constant 0 : index
    %178 = vector.load %arg7[%c8_113, %c0_114] : memref<72x16xf32, #tpu.memory_space<vmem>>, vector<64x16xf32>
    tpu.vector_store %arg7[%c8_113, %c0_114], %177 {strides = array<i32>} : memref<72x16xf32, #tpu.memory_space<vmem>>, vector<64x16xf32>,
    %179 = vector.extract_strided_slice %175 {offsets = [0, 16], sizes = [64, 32], strides = [1, 1]} : vector<64x48xf32> to vector<64x32xf32>
    %180 = arith.addf %145, %179 : vector<64x32xf32>
    %c8_115 = arith.constant 8 : index
    %c0_116 = arith.constant 0 : index
    %181 = vector.load %arg7[%c8_115, %c0_116] : memref<72x16xf32, #tpu.memory_space<vmem>>, vector<64x16xf32>
    %c4_117 = arith.constant 4 : index
    %c0_118 = arith.constant 0 : index
    %182 = vector.load %arg7[%c4_117, %c0_118] : memref<72x16xf32, #tpu.memory_space<vmem>>, vector<64x16xf32>
    %183 = tpu.concatenate %182, %181 in 1 : vector<64x16xf32>, vector<64x16xf32> -> vector<64x32xf32>
    %184 = arith.truncf %183 : vector<64x32xf32> to vector<64x32xbf16>
    %c5 = arith.constant 5 : index
    %c0_119 = arith.constant 0 : index
    %c0_120 = arith.constant 0 : index
    %185 = vector.load %arg2[%c5, %c0_119, %c0_120] : memref<6x32x32xbf16, #tpu.memory_space<vmem>>, vector<1x32x32xbf16>
    %186 = vector.shape_cast %185 : vector<1x32x32xbf16> to vector<32x32xbf16>
    %cst_121 = arith.constant dense<0.000000e+00> : vector<64x32xf32>
    %187 = tpu.matmul %184, %186, %cst_121 {dimension_numbers = #tpu.dot_dimension_numbers<[1], [0], [0], [1], [0, 0, 1, 1], [], []>} : vector<64x32xbf16>, vector<32x32xbf16>, vector<64x32xf32> -> vector<64x32xf32>
    %c5_122 = arith.constant 5 : index
    %c0_123 = arith.constant 0 : index
    %c0_124 = arith.constant 0 : index
    %188 = vector.load %arg3[%c5_122, %c0_123, %c0_124] : memref<6x1x32xf32, #tpu.memory_space<vmem>>, vector<1x1x32xf32>
    %189 = vector.shape_cast %188 : vector<1x1x32xf32> to vector<1x32xf32>
    %190 = vector.broadcast %189 : vector<1x32xf32> to vector<64x32xf32>
    %191 = arith.addf %187, %190 : vector<64x32xf32>
    %192 = vector.extract_strided_slice %191 {offsets = [0, 0], sizes = [64, 16], strides = [1, 1]} : vector<64x32xf32> to vector<64x16xf32>
    %193 = math.tanh %192 : vector<64x16xf32>
    %194 = vector.extract_strided_slice %191 {offsets = [0, 16], sizes = [64, 16], strides = [1, 1]} : vector<64x32xf32> to vector<64x16xf32>
    %cst_125 = arith.constant 5.000000e-01 : f32
    %195 = vector.broadcast %cst_125 : f32 to vector<64x16xf32>
    %196 = arith.mulf %195, %194 : vector<64x16xf32>
    %197 = math.tanh %196 : vector<64x16xf32>
    %cst_126 = arith.constant 1.000000e+00 : f32
    %198 = vector.broadcast %cst_126 : f32 to vector<64x16xf32>
    %199 = arith.addf %197, %198 : vector<64x16xf32>
    %cst_127 = arith.constant 5.000000e-01 : f32
    %200 = vector.broadcast %cst_127 : f32 to vector<64x16xf32>
    %201 = arith.mulf %200, %199 : vector<64x16xf32>
    %202 = arith.mulf %193, %201 : vector<64x16xf32>
    %203 = arith.truncf %202 : vector<64x16xf32> to vector<64x16xbf16>
    %c5_128 = arith.constant 5 : index
    %c0_129 = arith.constant 0 : index
    %c0_130 = arith.constant 0 : index
    %204 = vector.load %arg4[%c5_128, %c0_129, %c0_130] : memref<6x16x48xbf16, #tpu.memory_space<vmem>>, vector<1x16x48xbf16>
    %205 = vector.shape_cast %204 : vector<1x16x48xbf16> to vector<16x48xbf16>
    %cst_131 = arith.constant dense<0.000000e+00> : vector<64x48xf32>
    %206 = tpu.matmul %203, %205, %cst_131 {dimension_numbers = #tpu.dot_dimension_numbers<[1], [0], [0], [1], [0, 0, 1, 1], [], []>} : vector<64x16xbf16>, vector<16x48xbf16>, vector<64x48xf32> -> vector<64x48xf32>
    %c5_132 = arith.constant 5 : index
    %c0_133 = arith.constant 0 : index
    %c0_134 = arith.constant 0 : index
    %207 = vector.load %arg5[%c5_132, %c0_133, %c0_134] : memref<6x1x48xf32, #tpu.memory_space<vmem>>, vector<1x1x48xf32>
    %208 = vector.shape_cast %207 : vector<1x1x48xf32> to vector<1x48xf32>
    %209 = vector.broadcast %208 : vector<1x48xf32> to vector<64x48xf32>
    %210 = arith.addf %206, %209 : vector<64x48xf32>
    %211 = vector.extract_strided_slice %210 {offsets = [0, 0], sizes = [64, 16], strides = [1, 1]} : vector<64x48xf32> to vector<64x16xf32>
    %212 = arith.addf %181, %211 : vector<64x16xf32>
    %c8_135 = arith.constant 8 : index
    %c0_136 = arith.constant 0 : index
    %213 = vector.load %arg7[%c8_135, %c0_136] : memref<72x16xf32, #tpu.memory_space<vmem>>, vector<64x16xf32>
    tpu.vector_store %arg7[%c8_135, %c0_136], %212 {strides = array<i32>} : memref<72x16xf32, #tpu.memory_space<vmem>>, vector<64x16xf32>,
    %214 = vector.extract_strided_slice %210 {offsets = [0, 16], sizes = [64, 32], strides = [1, 1]} : vector<64x48xf32> to vector<64x32xf32>
    %215 = arith.addf %180, %214 : vector<64x32xf32>
    %c0_137 = arith.constant 0 : index
    %c0_138 = arith.constant 0 : index
    %c0_139 = arith.constant 0 : index
    %216 = vector.load %arg6[%c0_137, %c0_138, %c0_139] : memref<1x64x32xf32, #tpu.memory_space<vmem>>, vector<1x64x32xf32>
    %217 = vector.shape_cast %216 : vector<1x64x32xf32> to vector<64x32xf32>
    %218 = vector.shape_cast %215 : vector<64x32xf32> to vector<1x64x32xf32>
    tpu.vector_store %arg6[%c0_137, %c0_138, %c0_139], %218 {strides = array<i32>} : memref<1x64x32xf32, #tpu.memory_space<vmem>>, vector<1x64x32xf32>,
    return
  }
  func.func @transform_0(%arg0: i32) -> (i32, i32, i32) {
    %c0_i32 = arith.constant 0 : i32
    %c0_i32_0 = arith.constant 0 : i32
    %c0_i32_1 = arith.constant 0 : i32
    return %arg0, %c0_i32, %c0_i32_0 : i32, i32, i32
  }
  func.func @transform_1(%arg0: i32) -> (i32, i32, i32) {
    %c0_i32 = arith.constant 0 : i32
    %c0_i32_0 = arith.constant 0 : i32
    %c0_i32_1 = arith.constant 0 : i32
    %c0_i32_2 = arith.constant 0 : i32
    return %c0_i32, %c0_i32_0, %c0_i32_1 : i32, i32, i32
  }
  func.func @transform_2(%arg0: i32) -> (i32, i32, i32) {
    %c0_i32 = arith.constant 0 : i32
    %c0_i32_0 = arith.constant 0 : i32
    %c0_i32_1 = arith.constant 0 : i32
    %c0_i32_2 = arith.constant 0 : i32
    return %c0_i32, %c0_i32_0, %c0_i32_1 : i32, i32, i32
  }
  func.func @transform_3(%arg0: i32) -> (i32, i32, i32) {
    %c0_i32 = arith.constant 0 : i32
    %c0_i32_0 = arith.constant 0 : i32
    %c0_i32_1 = arith.constant 0 : i32
    %c0_i32_2 = arith.constant 0 : i32
    return %c0_i32, %c0_i32_0, %c0_i32_1 : i32, i32, i32
  }
  func.func @transform_4(%arg0: i32) -> (i32, i32, i32) {
    %c0_i32 = arith.constant 0 : i32
    %c0_i32_0 = arith.constant 0 : i32
    %c0_i32_1 = arith.constant 0 : i32
    %c0_i32_2 = arith.constant 0 : i32
    return %c0_i32, %c0_i32_0, %c0_i32_1 : i32, i32, i32
  }
  func.func @transform_5(%arg0: i32) -> (i32, i32, i32) {
    %c0_i32 = arith.constant 0 : i32
    %c0_i32_0 = arith.constant 0 : i32
    %c0_i32_1 = arith.constant 0 : i32
    return %arg0, %c0_i32, %c0_i32_0 : i32, i32, i32
  }
}

</mosaic_0001>

<llo_original>
// kernel: tpu_custom_call.1
$region0: #{tpu_custom_call.1}
  #allocation0 [shape = 'u32[]', space=smem, size = 0x4, offset = 0x4, fixed_abs, tag = 'smem constant byte address 0x4 - core index']
  #allocation1 [shape = 'u32[144,128]{1,0:T(1,128)}', space=vmem, size = 0x12000, scoped, tag = 'internal scratch']
  #allocation2 [shape = 'f32[72,16]{1,0:T(8,128)}', space=vmem, size = 0x9000, scoped, tag = 'scratch operand']
  %s0 = inlined_call_operand.vmem [shape: f32[2,64,16], index: 0, kind: input, shape index: {}]
  %s1 = inlined_call_operand.vmem [shape: bf16[6,32,32], index: 1, kind: input, shape index: {}]
  %s2 = inlined_call_operand.vmem [shape: f32[6,1,32], index: 2, kind: input, shape index: {}]
  %s3 = inlined_call_operand.vmem [shape: bf16[6,16,48], index: 3, kind: input, shape index: {}]
  %s4 = inlined_call_operand.vmem [shape: f32[6,1,48], index: 4, kind: input, shape index: {}]
  %s5 = inlined_call_operand.vmem [shape: f32[2,64,32], index: 5, kind: output, shape index: {}]
  %s6 = sld [smem:[#allocation0]]
  $region53: #{tpu_custom_call.1} parent=0
    _
  %s8 = ssub.s32 1, %s6
  %s9 = scalar_select 0, %s8, %s6
  loop: start=0, step=1, limit=4
  $region2: #{tpu_custom_call.1} parent=0 // loop_pre_header
    _
  $region3: #{tpu_custom_call.1} parent=0 // loop_header
    %s11 = sphi 0, %s15
    %p12 = scmp.ge.s32.totalorder %s11, 4
    %s21 = sphi 0, %s23
    %s24 = sphi 0, %s21
    %s25 = sphi 0, %s24
    %s41 = sphi 0, %s25
    %s45 = sphi 0, %s45
    %s47 = sphi 0, %s45
    %s48 = sphi 0, %s47
    %s62 = sphi 0, %s48
    %s66 = sphi 0, %s66
    %s68 = sphi 0, %s66
    %s69 = sphi 0, %s68
    %s83 = sphi 0, %s69
    %s87 = sphi 0, %s87
    %s89 = sphi 0, %s87
    %s90 = sphi 0, %s89
    %s104 = sphi 0, %s90
    %s108 = sphi 0, %s108
    %s110 = sphi 0, %s108
    %s111 = sphi 0, %s110
    %s125 = sphi 0, %s111
    %s131 = sphi 0, %s133
    %s134 = sphi 0, %s131
    %s135 = sphi 0, %s134
    %s151 = sphi 0, %s135
  $region4: #{tpu_custom_call.1} parent=0 // loop_header_branch
    %14 = sbr.rel (%p12) target = $region8
  $region5: #{tpu_custom_call.1} parent=0 // loop_body
    %s16 = ssub.s32 %s11, 1
    %s17 = ssub.s32 %s11, 2
    %s18 = sadd.s32 %s11, 1
    %s19 = ssub.s32 %s11, %s18
    %p20 = scmp.eq.s32.totalorder %s19, 0
    %s22 = sadd.s32 %s21, 1
    %s23 = scalar_select %p20, %s21, %s22
    %p26 = pneg %p20
    %p27 = scmp.eq.s32.totalorder %s11, 1
    %p28 = por %p26, %p27
    %p29 = scmp.ne.s32.totalorder %s21, %s24
    %p30 = scmp.eq.s32.totalorder %s11, 0
    %p31 = por %p29, %p30
    %p32 = scmp.ne.s32.totalorder %s21, %s24
    %p33 = scmp.eq.s32.totalorder %s16, 1
    %p34 = por %p32, %p33
    %p35 = scmp.ne.s32.totalorder %s24, %s25
    %p36 = scmp.eq.s32.totalorder %s16, 0
    %p37 = por %p35, %p36
    %p38 = scmp.ne.s32.totalorder %s24, %s25
    %p39 = scmp.eq.s32.totalorder %s17, 1
    %p40 = por %p38, %p39
    %p42 = scmp.ne.s32.totalorder %s25, %s41
    %p43 = scmp.eq.s32.totalorder %s17, 0
    %p44 = por %p42, %p43
    %s46 = sadd.s32 %s45, 1
    %p49 = scmp.eq.s32.totalorder %s11, 1
    %p50 = scmp.ne.s32.totalorder %s45, %s47
    %p51 = scmp.eq.s32.totalorder %s11, 0
    %p52 = por %p50, %p51
    %p53 = scmp.ne.s32.totalorder %s45, %s47
    %p54 = scmp.eq.s32.totalorder %s16, 1
    %p55 = por %p53, %p54
    %p56 = scmp.ne.s32.totalorder %s47, %s48
    %p57 = scmp.eq.s32.totalorder %s16, 0
    %p58 = por %p56, %p57
    %p59 = scmp.ne.s32.totalorder %s47, %s48
    %p60 = scmp.eq.s32.totalorder %s17, 1
    %p61 = por %p59, %p60
    %p63 = scmp.ne.s32.totalorder %s48, %s62
    %p64 = scmp.eq.s32.totalorder %s17, 0
    %p65 = por %p63, %p64
    %s67 = sadd.s32 %s66, 1
    %p70 = scmp.eq.s32.totalorder %s11, 1
    %p71 = scmp.ne.s32.totalorder %s66, %s68
    %p72 = scmp.eq.s32.totalorder %s11, 0
    %p73 = por %p71, %p72
    %p74 = scmp.ne.s32.totalorder %s66, %s68
    %p75 = scmp.eq.s32.totalorder %s16, 1
    %p76 = por %p74, %p75
    %p77 = scmp.ne.s32.totalorder %s68, %s69
    %p78 = scmp.eq.s32.totalorder %s16, 0
    %p79 = por %p77, %p78
    %p80 = scmp.ne.s32.totalorder %s68, %s69
    %p81 = scmp.eq.s32.totalorder %s17, 1
    %p82 = por %p80, %p81
    %p84 = scmp.ne.s32.totalorder %s69, %s83
    %p85 = scmp.eq.s32.totalorder %s17, 0
    %p86 = por %p84, %p85
    %s88 = sadd.s32 %s87, 1
    %p91 = scmp.eq.s32.totalorder %s11, 1
    %p92 = scmp.ne.s32.totalorder %s87, %s89
    %p93 = scmp.eq.s32.totalorder %s11, 0
    %p94 = por %p92, %p93
    %p95 = scmp.ne.s32.totalorder %s87, %s89
    %p96 = scmp.eq.s32.totalorder %s16, 1
    %p97 = por %p95, %p96
    %p98 = scmp.ne.s32.totalorder %s89, %s90
    %p99 = scmp.eq.s32.totalorder %s16, 0
    %p100 = por %p98, %p99
    %p101 = scmp.ne.s32.totalorder %s89, %s90
    %p102 = scmp.eq.s32.totalorder %s17, 1
    %p103 = por %p101, %p102
    %p105 = scmp.ne.s32.totalorder %s90, %s104
    %p106 = scmp.eq.s32.totalorder %s17, 0
    %p107 = por %p105, %p106
    %s109 = sadd.s32 %s108, 1
    %p112 = scmp.eq.s32.totalorder %s11, 1
    %p113 = scmp.ne.s32.totalorder %s108, %s110
    %p114 = scmp.eq.s32.totalorder %s11, 0
    %p115 = por %p113, %p114
    %p116 = scmp.ne.s32.totalorder %s108, %s110
    %p117 = scmp.eq.s32.totalorder %s16, 1
    %p118 = por %p116, %p117
    %p119 = scmp.ne.s32.totalorder %s110, %s111
    %p120 = scmp.eq.s32.totalorder %s16, 0
    %p121 = por %p119, %p120
    %p122 = scmp.ne.s32.totalorder %s110, %s111
    %p123 = scmp.eq.s32.totalorder %s17, 1
    %p124 = por %p122, %p123
    %p126 = scmp.ne.s32.totalorder %s111, %s125
    %p127 = scmp.eq.s32.totalorder %s17, 0
    %p128 = por %p126, %p127
    %s129 = ssub.s32 %s11, %s18
    %p130 = scmp.eq.s32.totalorder %s129, 0
    %s132 = sadd.s32 %s131, 1
    %s133 = scalar_select %p130, %s131, %s132
    %p136 = pneg %p130
    %p137 = scmp.eq.s32.totalorder %s11, 1
    %p138 = por %p136, %p137
    %p139 = scmp.ne.s32.totalorder %s131, %s134
    %p140 = scmp.eq.s32.totalorder %s11, 0
    %p141 = por %p139, %p140
    %p142 = scmp.ne.s32.totalorder %s131, %s134
    %p143 = scmp.eq.s32.totalorder %s16, 1
    %p144 = por %p142, %p143
    %p145 = scmp.ne.s32.totalorder %s134, %s135
    %p146 = scmp.eq.s32.totalorder %s16, 0
    %p147 = por %p145, %p146
    %p148 = scmp.ne.s32.totalorder %s134, %s135
    %p149 = scmp.eq.s32.totalorder %s17, 1
    %p150 = por %p148, %p149
    %p152 = scmp.ne.s32.totalorder %s135, %s151
    %p153 = scmp.eq.s32.totalorder %s17, 0
    %p154 = por %p152, %p153
    %p155 = scmp.le.s32.totalorder 1, %s11
    %p156 = scmp.lt.s32.totalorder %s11, 3
    %p157 = pnand %p155, %p156
    %p158 = pneg %p157
    // Predicated region
    $region9: #{tpu_custom_call.1} parent=5 // pred_check
      _
    $region10: #{tpu_custom_call.1} parent=5 // pred_check_branch
      %160 = sbr.rel (%p157) target = $region12
    $region11: #{tpu_custom_call.1} parent=5 // pred_region
      %s161 = ssub.s32 %s11, 1
      // Predicated region
      $region13: #{tpu_custom_call.1} parent=11 // pred_check
        %p162 = pneg %p58
      $region14: #{tpu_custom_call.1} parent=11 // pred_check_branch
        %164 = sbr.rel (%p162) target = $region16
      $region15: #{tpu_custom_call.1} parent=11 // pred_region
        _
      $region16: #{tpu_custom_call.1} parent=11 // pred_fallthru
        _
      // Predicated region
      $region17: #{tpu_custom_call.1} parent=11 // pred_check
        %p165 = pneg %p79
      $region18: #{tpu_custom_call.1} parent=11 // pred_check_branch
        %167 = sbr.rel (%p165) target = $region20
      $region19: #{tpu_custom_call.1} parent=11 // pred_region
        _
      $region20: #{tpu_custom_call.1} parent=11 // pred_fallthru
        _
      // Predicated region
      $region21: #{tpu_custom_call.1} parent=11 // pred_check
        %p168 = pneg %p100
      $region22: #{tpu_custom_call.1} parent=11 // pred_check_branch
        %170 = sbr.rel (%p168) target = $region24
      $region23: #{tpu_custom_call.1} parent=11 // pred_region
        _
      $region24: #{tpu_custom_call.1} parent=11 // pred_fallthru
        _
      // Predicated region
      $region25: #{tpu_custom_call.1} parent=11 // pred_check
        %p171 = pneg %p121
      $region26: #{tpu_custom_call.1} parent=11 // pred_check_branch
        %173 = sbr.rel (%p171) target = $region28
      $region27: #{tpu_custom_call.1} parent=11 // pred_region
        _
      $region28: #{tpu_custom_call.1} parent=11 // pred_fallthru
        _
    $region12: #{tpu_custom_call.1} parent=5 // pred_fallthru
      _
    %p174 = scmp.lt.s32.totalorder %s11, 2
    // Predicated region
    $region29: #{tpu_custom_call.1} parent=5 // pred_check
      %p175 = pneg %p174
    $region30: #{tpu_custom_call.1} parent=5 // pred_check_branch
      %177 = sbr.rel (%p175) target = $region32
    $region31: #{tpu_custom_call.1} parent=5 // pred_region
      // Predicated region
      $region33: #{tpu_custom_call.1} parent=31 // pred_check
        %p178 = pneg %p31
      $region34: #{tpu_custom_call.1} parent=31 // pred_check_branch
        %180 = sbr.rel (%p178) target = $region36
      $region35: #{tpu_custom_call.1} parent=31 // pred_region
        %p181 = scmp.lt.s32.totalorder %s11, 1
        %s182 = scalar_select %p181, %s11, 1
        %s183 = smul.addr %s182, 8
        %s184 = smul.addr %s183, 8
        %s185 = scalar_lea.vmem %s0, %s184
      $region36: #{tpu_custom_call.1} parent=31 // pred_fallthru
        _
    $region32: #{tpu_custom_call.1} parent=5 // pred_fallthru
      _
    %p186 = scmp.le.s32.totalorder 1, %s11
    %p187 = scmp.lt.s32.totalorder %s11, 3
    %p188 = pnand %p186, %p187
    %p189 = pneg %p188
    // Predicated region
    $region37: #{tpu_custom_call.1} parent=5 // pred_check
      _
    $region38: #{tpu_custom_call.1} parent=5 // pred_check_branch
      %191 = sbr.rel (%p188) target = $region40
    $region39: #{tpu_custom_call.1} parent=5 // pred_region
      %s192 = ssub.s32 %s11, 1
      %p193 = scmp.lt.s32.totalorder %s16, 1
      %s194 = scalar_select %p193, %s16, 1
      %s195 = smul.addr %s194, 8
      %s196 = smul.addr %s195, 8
      %s197 = scalar_lea.vmem %s0, %s196
      %p198 = pneg %p37
      %p199 = pneg %p34
      %p200 = pneg %p58
      %p201 = pneg %p55
      %p202 = pneg %p79
      %p203 = pneg %p76
      %p204 = pneg %p100
      %p205 = pneg %p97
      %p206 = pneg %p121
      %p207 = pneg %p118
      %p208 = pneg %p147
      %p209 = pneg %p144
      %p210 = scmp.lt.s32.totalorder %s16, 1
      %s211 = scalar_select %p210, %s16, 1
      %s212 = smul.addr %s211, 8
      %s213 = smul.addr %s212, 8
      %s214 = scalar_lea.vmem %s5, %s213
      %p215 = scmp.lt.s32.totalorder %s16, 1
      %s216 = scalar_select %p215, %s16, 1
      %s217 = smul.addr %s216, 8
      %s218 = smul.addr %s217, 8
      %s219 = scalar_lea.vmem %s0, %s218
      %p220 = scmp.lt.s32.totalorder %s16, 1
      %s221 = scalar_select %p220, %s16, 1
      %s222 = smul.addr %s221, 8
      %s223 = smul.addr %s222, 8
      %s224 = scalar_lea.vmem %s5, %s223
      %vm226 = vcmask 130048
      %227 = vst.msk [vmem:[#allocation2] sm:$0xff] %vm226, 0.0
      %v228 = vld [vmem:[%s219] sm:$0xff]
      %v229 = vld [vmem:[%s219 + $0x8] sm:$0xff]
      %v230 = vld [vmem:[%s219 + $0x10] sm:$0xff]
      %v231 = vld [vmem:[%s219 + $0x18] sm:$0xff]
      %v232 = vld [vmem:[%s219 + $0x20] sm:$0xff]
      %v233 = vld [vmem:[%s219 + $0x28] sm:$0xff]
      %v234 = vld [vmem:[%s219 + $0x30] sm:$0xff]
      %v235 = vld [vmem:[%s219 + $0x38] sm:$0xff]
      %236 = vst.msk [vmem:[#allocation2 + $0x8] sm:$0xff] %vm226, %v228
      %237 = vst.msk [vmem:[#allocation2 + $0x10] sm:$0xff] %vm226, %v229
      %238 = vst.msk [vmem:[#allocation2 + $0x18] sm:$0xff] %vm226, %v230
      %239 = vst.msk [vmem:[#allocation2 + $0x20] sm:$0xff] %vm226, %v231
      %240 = vst.msk [vmem:[#allocation2 + $0x28] sm:$0xff] %vm226, %v232
      %241 = vst.msk [vmem:[#allocation2 + $0x30] sm:$0xff] %vm226, %v233
      %242 = vst.msk [vmem:[#allocation2 + $0x38] sm:$0xff] %vm226, %v234
      %243 = vst.msk [vmem:[#allocation2 + $0x40] sm:$0xff] %vm226, %v235
      %v244 = vld [vmem:[#allocation2 + $0x8] sm:$0xff]
      %v245 = vld [vmem:[#allocation2 + $0x10] sm:$0xff]
      %v246 = vld [vmem:[#allocation2 + $0x18] sm:$0xff]
      %v247 = vld [vmem:[#allocation2 + $0x20] sm:$0xff]
      %v248 = vld [vmem:[#allocation2 + $0x28] sm:$0xff]
      %v249 = vld [vmem:[#allocation2 + $0x30] sm:$0xff]
      %v250 = vld [vmem:[#allocation2 + $0x38] sm:$0xff]
      %v251 = vld [vmem:[#allocation2 + $0x40] sm:$0xff]
      %v252 = vld [vmem:[#allocation2 + $0x7] sm:$0xff]
      %v253 = vld [vmem:[#allocation2 + $0xf] sm:$0xff]
      %v254 = vld [vmem:[#allocation2 + $0x17] sm:$0xff]
      %v255 = vld [vmem:[#allocation2 + $0x1f] sm:$0xff]
      %v256 = vld [vmem:[#allocation2 + $0x27] sm:$0xff]
      %v257 = vld [vmem:[#allocation2 + $0x2f] sm:$0xff]
      %v258 = vld [vmem:[#allocation2 + $0x37] sm:$0xff]
      %v259 = vld [vmem:[#allocation2 + $0x3f] sm:$0xff]
      %268 = vrot.lane.b32.xlu0 %v244, 16
      %v269 = vpop.permute.xlu0 %268
      %270 = vrot.lane.b32.xlu0 %v245, 16
      %v271 = vpop.permute.xlu0 %270
      %272 = vrot.lane.b32.xlu0 %v246, 16
      %v273 = vpop.permute.xlu0 %272
      %274 = vrot.lane.b32.xlu0 %v247, 16
      %v275 = vpop.permute.xlu0 %274
      %276 = vrot.lane.b32.xlu0 %v248, 16
      %v277 = vpop.permute.xlu0 %276
      %278 = vrot.lane.b32.xlu0 %v249, 16
      %v279 = vpop.permute.xlu0 %278
      %280 = vrot.lane.b32.xlu0 %v250, 16
      %v281 = vpop.permute.xlu0 %280
      %282 = vrot.lane.b32.xlu0 %v251, 16
      %v283 = vpop.permute.xlu0 %282
      %v292 = vsel %vm226, %v252, %v269
      %v293 = vsel %vm226, %v253, %v271
      %v294 = vsel %vm226, %v254, %v273
      %v295 = vsel %vm226, %v255, %v275
      %v296 = vsel %vm226, %v256, %v277
      %v297 = vsel %vm226, %v257, %v279
      %v298 = vsel %vm226, %v258, %v281
      %v299 = vsel %vm226, %v259, %v283
      %v300 = vpack.c.bf16 %v293, %v292
      %v301 = vpack.c.bf16 %v295, %v294
      %v302 = vpack.c.bf16 %v297, %v296
      %v303 = vpack.c.bf16 %v299, %v298
      %v304 = vld [vmem:[%s1] sm:$0xf]
      %v305 = vld [vmem:[%s1 + $0x4] sm:$0xf]
      %v306 = vld [vmem:[%s1 + $0x8] sm:$0xf]
      %v307 = vld [vmem:[%s1 + $0xc] sm:$0xf]
      %v308 = vld [vmem:[%s2] sm:$0x1]
      %v310 = vlaneseq
      %v311 = vshrl.u32 %v310, 7
      %v312 = vsub.s32 0, %v311
      %v313 = vrot.slane %v308, %v312
      %v319 = vunpack.c.l.b16 %v304
      %v320 = vunpack.c.l.b16 %v305
      %v321 = vunpack.c.l.b16 %v306
      %v322 = vunpack.c.l.b16 %v307
      %v323 = vpack.c.b16 %v320, %v319
      %v324 = vpack.c.b16 %v322, %v321
      %vm327 = vcmask 261120
      %v329 = vsel %vm327, %v300, 0
      %v332 = vsel %vm327, %v301, 0
      %v335 = vsel %vm327, %v302, 0
      %v338 = vsel %vm327, %v303, 0
      %340 = vmatprep.subr.bf16.mxu0 0
      %341 = vmatpush1.bf16.msra.mxu0 %v323
      %342 = vmatprep.subr.bf16.mxu0 0
      %343 = vmatpush1.bf16.msra.mxu0 %v324
      %344 = vmatprep.subr.bf16.mxu0 0
      %345 = vmatpush1.bf16.msra.mxu0 0
      %346 = vmatprep.subr.bf16.mxu0 0
      %347 = vmatpush1.bf16.msra.mxu0 0
      %348 = vmatprep.subr.bf16.mxu0 0
      %349 = vmatpush1.bf16.msra.mxu0 0
      %350 = vmatprep.subr.bf16.mxu0 0
      %351 = vmatpush1.bf16.msra.mxu0 0
      %352 = vmatprep.subr.bf16.mxu0 0
      %353 = vmatpush1.bf16.msra.mxu0 0
      %354 = vmatprep.subr.bf16.mxu0 0
      %355 = vmatpush1.bf16.msra.mxu0 0
      %356 = vmatprep.subr.bf16.mxu0 0
      %357 = vmatpush1.bf16.msra.mxu0 0
      %358 = vmatprep.subr.bf16.mxu0 0
      %359 = vmatpush1.bf16.msra.mxu0 0
      %360 = vmatprep.subr.bf16.mxu0 0
      %361 = vmatpush1.bf16.msra.mxu0 0
      %362 = vmatprep.subr.bf16.mxu0 0
      %363 = vmatpush1.bf16.msra.mxu0 0
      %364 = vmatprep.subr.bf16.mxu0 0
      %365 = vmatpush1.bf16.msra.mxu0 0
      %366 = vmatprep.subr.bf16.mxu0 0
      %367 = vmatpush1.bf16.msra.mxu0 0
      %368 = vmatprep.subr.bf16.mxu0 0
      %369 = vmatpush1.bf16.msra.mxu0 0
      %370 = vmatprep.subr.bf16.mxu0 0
      %371 = vmatpush1.bf16.msra.mxu0 0
      %372 = vmatprep.mubr.bf16.mxu0 0
      %373 = vmatmul.mubr.bf16.gmra.mrb[0].mxu0 %v329
      %v374 = vpop.f32.mrb[0].mxu0
      %v375 = vadd.f32 %v313, %v374
      %v376 = vpop.f32.mrb[0].mxu0
      %v377 = vpop.f32.mrb[0].mxu0
      %v378 = vadd.f32 %v313, %v377
      %v379 = vpop.f32.mrb[0].mxu0
      %380 = vmatprep.mubr.bf16.mxu0 0
      %381 = vmatmul.mubr.bf16.gmra.mrb[0].mxu0 %v332
      %v382 = vpop.f32.mrb[0].mxu0
      %v383 = vadd.f32 %v313, %v382
      %v384 = vpop.f32.mrb[0].mxu0
      %v385 = vpop.f32.mrb[0].mxu0
      %v386 = vadd.f32 %v313, %v385
      %v387 = vpop.f32.mrb[0].mxu0
      %388 = vmatprep.mubr.bf16.mxu0 0
      %389 = vmatmul.mubr.bf16.gmra.mrb[0].mxu0 %v335
      %v390 = vpop.f32.mrb[0].mxu0
      %v391 = vadd.f32 %v313, %v390
      %v392 = vpop.f32.mrb[0].mxu0
      %v393 = vpop.f32.mrb[0].mxu0
      %v394 = vadd.f32 %v313, %v393
      %v395 = vpop.f32.mrb[0].mxu0
      %396 = vmatprep.mubr.bf16.mxu0 0
      %397 = vmatmul.mubr.bf16.gmra.mrb[0].mxu0 %v338
      %v398 = vpop.f32.mrb[0].mxu0
      %v399 = vadd.f32 %v313, %v398
      %v400 = vpop.f32.mrb[0].mxu0
      %v401 = vpop.f32.mrb[0].mxu0
      %v402 = vadd.f32 %v313, %v401
      %v403 = vpop.f32.mrb[0].mxu0
      %404 = vdwg.mxu0
      %v405 = vtanh.pop %v375
      %v406 = vtanh.pop %v378
      %v407 = vtanh.pop %v383
      %v408 = vtanh.pop %v386
      %v409 = vtanh.pop %v391
      %v410 = vtanh.pop %v394
      %v411 = vtanh.pop %v399
      %v412 = vtanh.pop %v402
      %v413 = vmul.f32 %v375, 0.5
      %v414 = vmul.f32 %v378, 0.5
      %v415 = vmul.f32 %v383, 0.5
      %v416 = vmul.f32 %v386, 0.5
      %v417 = vmul.f32 %v391, 0.5
      %v418 = vmul.f32 %v394, 0.5
      %v419 = vmul.f32 %v399, 0.5
      %v420 = vmul.f32 %v402, 0.5
      %v421 = vtanh.pop %v413
      %v422 = vtanh.pop %v414
      %v423 = vtanh.pop %v415
      %v424 = vtanh.pop %v416
      %v425 = vtanh.pop %v417
      %v426 = vtanh.pop %v418
      %v427 = vtanh.pop %v419
      %v428 = vtanh.pop %v420
      %v429 = vadd.f32 %v421, 1.0
      %v430 = vadd.f32 %v422, 1.0
      %v431 = vadd.f32 %v423, 1.0
      %v432 = vadd.f32 %v424, 1.0
      %v433 = vadd.f32 %v425, 1.0
      %v434 = vadd.f32 %v426, 1.0
      %v435 = vadd.f32 %v427, 1.0
      %v436 = vadd.f32 %v428, 1.0
      %v437 = vmul.f32 %v429, 0.5
      %v438 = vmul.f32 %v430, 0.5
      %v439 = vmul.f32 %v431, 0.5
      %v440 = vmul.f32 %v432, 0.5
      %v441 = vmul.f32 %v433, 0.5
      %v442 = vmul.f32 %v434, 0.5
      %v443 = vmul.f32 %v435, 0.5
      %v444 = vmul.f32 %v436, 0.5
      %453 = vrot.lane.b32.xlu0 %v437, 112
      %v454 = vpop.permute.xlu0 %453
      %455 = vrot.lane.b32.xlu0 %v438, 112
      %v456 = vpop.permute.xlu0 %455
      %457 = vrot.lane.b32.xlu0 %v439, 112
      %v458 = vpop.permute.xlu0 %457
      %459 = vrot.lane.b32.xlu0 %v440, 112
      %v460 = vpop.permute.xlu0 %459
      %461 = vrot.lane.b32.xlu0 %v441, 112
      %v462 = vpop.permute.xlu0 %461
      %463 = vrot.lane.b32.xlu0 %v442, 112
      %v464 = vpop.permute.xlu0 %463
      %465 = vrot.lane.b32.xlu0 %v443, 112
      %v466 = vpop.permute.xlu0 %465
      %467 = vrot.lane.b32.xlu0 %v444, 112
      %v468 = vpop.permute.xlu0 %467
      %v477 = vmul.f32 %v405, %v454
      %v478 = vmul.f32 %v406, %v456
      %v479 = vmul.f32 %v407, %v458
      %v480 = vmul.f32 %v408, %v460
      %v481 = vmul.f32 %v409, %v462
      %v482 = vmul.f32 %v410, %v464
      %v483 = vmul.f32 %v411, %v466
      %v484 = vmul.f32 %v412, %v468
      %v485 = vpack.c.bf16 %v478, %v477
      %v486 = vpack.c.bf16 %v480, %v479
      %v487 = vpack.c.bf16 %v482, %v481
      %v488 = vpack.c.bf16 %v484, %v483
      %v489 = vld [vmem:[%s3] sm:$0xf]
      %v490 = vld [vmem:[%s3 + $0x4] sm:$0xf]
      %v491 = vld [vmem:[%s4] sm:$0x1]
      %v493 = vlaneseq
      %v494 = vshrl.u32 %v493, 7
      %v495 = vsub.s32 0, %v494
      %v496 = vrot.slane %v491, %v495
      %v500 = vunpack.c.l.b16 %v489
      %v501 = vunpack.c.l.b16 %v490
      %v502 = vpack.c.b16 %v501, %v500
      %v505 = vsel %vm226, %v485, 0
      %v508 = vsel %vm226, %v486, 0
      %v511 = vsel %vm226, %v487, 0
      %v514 = vsel %vm226, %v488, 0
      %516 = vmatprep.subr.bf16.mxu0 0
      %517 = vmatpush1.bf16.msra.mxu0 %v502
      %518 = vmatprep.subr.bf16.mxu0 0
      %519 = vmatpush1.bf16.msra.mxu0 0
      %520 = vmatprep.subr.bf16.mxu0 0
      %521 = vmatpush1.bf16.msra.mxu0 0
      %522 = vmatprep.subr.bf16.mxu0 0
      %523 = vmatpush1.bf16.msra.mxu0 0
      %524 = vmatprep.subr.bf16.mxu0 0
      %525 = vmatpush1.bf16.msra.mxu0 0
      %526 = vmatprep.subr.bf16.mxu0 0
      %527 = vmatpush1.bf16.msra.mxu0 0
      %528 = vmatprep.subr.bf16.mxu0 0
      %529 = vmatpush1.bf16.msra.mxu0 0
      %530 = vmatprep.subr.bf16.mxu0 0
      %531 = vmatpush1.bf16.msra.mxu0 0
      %532 = vmatprep.subr.bf16.mxu0 0
      %533 = vmatpush1.bf16.msra.mxu0 0
      %534 = vmatprep.subr.bf16.mxu0 0
      %535 = vmatpush1.bf16.msra.mxu0 0
      %536 = vmatprep.subr.bf16.mxu0 0
      %537 = vmatpush1.bf16.msra.mxu0 0
      %538 = vmatprep.subr.bf16.mxu0 0
      %539 = vmatpush1.bf16.msra.mxu0 0
      %540 = vmatprep.subr.bf16.mxu0 0
      %541 = vmatpush1.bf16.msra.mxu0 0
      %542 = vmatprep.subr.bf16.mxu0 0
      %543 = vmatpush1.bf16.msra.mxu0 0
      %544 = vmatprep.subr.bf16.mxu0 0
      %545 = vmatpush1.bf16.msra.mxu0 0
      %546 = vmatprep.subr.bf16.mxu0 0
      %547 = vmatpush1.bf16.msra.mxu0 0
      %548 = vmatprep.mubr.bf16.mxu0 0
      %549 = vmatmul.mubr.bf16.gmra.mrb[0].mxu0 %v505
      %v550 = vpop.f32.mrb[0].mxu0
      %v551 = vadd.f32 %v496, %v550
      %v552 = vpop.f32.mrb[0].mxu0
      %v553 = vpop.f32.mrb[0].mxu0
      %v554 = vadd.f32 %v496, %v553
      %v555 = vpop.f32.mrb[0].mxu0
      %556 = vmatprep.mubr.bf16.mxu0 0
      %557 = vmatmul.mubr.bf16.gmra.mrb[0].mxu0 %v508
      %v558 = vpop.f32.mrb[0].mxu0
      %v559 = vadd.f32 %v496, %v558
      %v560 = vpop.f32.mrb[0].mxu0
      %v561 = vpop.f32.mrb[0].mxu0
      %v562 = vadd.f32 %v496, %v561
      %v563 = vpop.f32.mrb[0].mxu0
      %564 = vmatprep.mubr.bf16.mxu0 0
      %565 = vmatmul.mubr.bf16.gmra.mrb[0].mxu0 %v511
      %v566 = vpop.f32.mrb[0].mxu0
      %v567 = vadd.f32 %v496, %v566
      %v568 = vpop.f32.mrb[0].mxu0
      %v569 = vpop.f32.mrb[0].mxu0
      %v570 = vadd.f32 %v496, %v569
      %v571 = vpop.f32.mrb[0].mxu0
      %572 = vmatprep.mubr.bf16.mxu0 0
      %573 = vmatmul.mubr.bf16.gmra.mrb[0].mxu0 %v514
      %v574 = vpop.f32.mrb[0].mxu0
      %v575 = vadd.f32 %v496, %v574
      %v576 = vpop.f32.mrb[0].mxu0
      %v577 = vpop.f32.mrb[0].mxu0
      %v578 = vadd.f32 %v496, %v577
      %v579 = vpop.f32.mrb[0].mxu0
      %580 = vdwg.mxu0
      %v581 = vadd.f32 %v244, %v551
      %v582 = vadd.f32 %v245, %v554
      %v583 = vadd.f32 %v246, %v559
      %v584 = vadd.f32 %v247, %v562
      %v585 = vadd.f32 %v248, %v567
      %v586 = vadd.f32 %v249, %v570
      %v587 = vadd.f32 %v250, %v575
      %v588 = vadd.f32 %v251, %v578
      %589 = vst.msk [vmem:[#allocation2 + $0x8] sm:$0xff] %vm226, %v581
      %590 = vst.msk [vmem:[#allocation2 + $0x10] sm:$0xff] %vm226, %v582
      %591 = vst.msk [vmem:[#allocation2 + $0x18] sm:$0xff] %vm226, %v583
      %592 = vst.msk [vmem:[#allocation2 + $0x20] sm:$0xff] %vm226, %v584
      %593 = vst.msk [vmem:[#allocation2 + $0x28] sm:$0xff] %vm226, %v585
      %594 = vst.msk [vmem:[#allocation2 + $0x30] sm:$0xff] %vm226, %v586
      %595 = vst.msk [vmem:[#allocation2 + $0x38] sm:$0xff] %vm226, %v587
      %596 = vst.msk [vmem:[#allocation2 + $0x40] sm:$0xff] %vm226, %v588
      %v597 = vadd.f32 %v551, 0.0
      %v598 = vadd.f32 %v554, 0.0
      %v599 = vadd.f32 %v559, 0.0
      %v600 = vadd.f32 %v562, 0.0
      %v601 = vadd.f32 %v567, 0.0
      %v602 = vadd.f32 %v570, 0.0
      %v603 = vadd.f32 %v575, 0.0
      %v604 = vadd.f32 %v578, 0.0
      %v605 = vld [vmem:[#allocation2 + $0x8] sm:$0xff]
      %v606 = vld [vmem:[#allocation2 + $0x10] sm:$0xff]
      %v607 = vld [vmem:[#allocation2 + $0x18] sm:$0xff]
      %v608 = vld [vmem:[#allocation2 + $0x20] sm:$0xff]
      %v609 = vld [vmem:[#allocation2 + $0x28] sm:$0xff]
      %v610 = vld [vmem:[#allocation2 + $0x30] sm:$0xff]
      %v611 = vld [vmem:[#allocation2 + $0x38] sm:$0xff]
      %v612 = vld [vmem:[#allocation2 + $0x40] sm:$0xff]
      %v613 = vld [vmem:[#allocation2 + $0x6] sm:$0xff]
      %v614 = vld [vmem:[#allocation2 + $0xe] sm:$0xff]
      %v615 = vld [vmem:[#allocation2 + $0x16] sm:$0xff]
      %v616 = vld [vmem:[#allocation2 + $0x1e] sm:$0xff]
      %v617 = vld [vmem:[#allocation2 + $0x26] sm:$0xff]
      %v618 = vld [vmem:[#allocation2 + $0x2e] sm:$0xff]
      %v619 = vld [vmem:[#allocation2 + $0x36] sm:$0xff]
      %v620 = vld [vmem:[#allocation2 + $0x3e] sm:$0xff]
      %629 = vrot.lane.b32.xlu0 %v605, 16
      %v630 = vpop.permute.xlu0 %629
      %631 = vrot.lane.b32.xlu0 %v606, 16
      %v632 = vpop.permute.xlu0 %631
      %633 = vrot.lane.b32.xlu0 %v607, 16
      %v634 = vpop.permute.xlu0 %633
      %635 = vrot.lane.b32.xlu0 %v608, 16
      %v636 = vpop.permute.xlu0 %635
      %637 = vrot.lane.b32.xlu0 %v609, 16
      %v638 = vpop.permute.xlu0 %637
      %639 = vrot.lane.b32.xlu0 %v610, 16
      %v640 = vpop.permute.xlu0 %639
      %641 = vrot.lane.b32.xlu0 %v611, 16
      %v642 = vpop.permute.xlu0 %641
      %643 = vrot.lane.b32.xlu0 %v612, 16
      %v644 = vpop.permute.xlu0 %643
      %v653 = vsel %vm226, %v613, %v630
      %v654 = vsel %vm226, %v614, %v632
      %v655 = vsel %vm226, %v615, %v634
      %v656 = vsel %vm226, %v616, %v636
      %v657 = vsel %vm226, %v617, %v638
      %v658 = vsel %vm226, %v618, %v640
      %v659 = vsel %vm226, %v619, %v642
      %v660 = vsel %vm226, %v620, %v644
      %v661 = vpack.c.bf16 %v654, %v653
      %v662 = vpack.c.bf16 %v656, %v655
      %v663 = vpack.c.bf16 %v658, %v657
      %v664 = vpack.c.bf16 %v660, %v659
      %s665 = scalar_lea.vmem %s1, 16
      %v666 = vld [vmem:[%s665] sm:$0xf]
      %v667 = vld [vmem:[%s665 + $0x4] sm:$0xf]
      %v668 = vld [vmem:[%s665 + $0x8] sm:$0xf]
      %v669 = vld [vmem:[%s665 + $0xc] sm:$0xf]
      %s670 = scalar_lea.vmem %s2, 1
      %v671 = vld [vmem:[%s670] sm:$0x1]
      %v673 = vlaneseq
      %v674 = vshrl.u32 %v673, 7
      %v675 = vsub.s32 0, %v674
      %v676 = vrot.slane %v671, %v675
      %v682 = vunpack.c.l.b16 %v666
      %v683 = vunpack.c.l.b16 %v667
      %v684 = vunpack.c.l.b16 %v668
      %v685 = vunpack.c.l.b16 %v669
      %v686 = vpack.c.b16 %v683, %v682
      %v687 = vpack.c.b16 %v685, %v684
      %v691 = vsel %vm327, %v661, 0
      %v694 = vsel %vm327, %v662, 0
      %v697 = vsel %vm327, %v663, 0
      %v700 = vsel %vm327, %v664, 0
      %702 = vmatprep.subr.bf16.mxu0 0
      %703 = vmatpush1.bf16.msra.mxu0 %v686
      %704 = vmatprep.subr.bf16.mxu0 0
      %705 = vmatpush1.bf16.msra.mxu0 %v687
      %706 = vmatprep.subr.bf16.mxu0 0
      %707 = vmatpush1.bf16.msra.mxu0 0
      %708 = vmatprep.subr.bf16.mxu0 0
      %709 = vmatpush1.bf16.msra.mxu0 0
      %710 = vmatprep.subr.bf16.mxu0 0
      %711 = vmatpush1.bf16.msra.mxu0 0
      %712 = vmatprep.subr.bf16.mxu0 0
      %713 = vmatpush1.bf16.msra.mxu0 0
      %714 = vmatprep.subr.bf16.mxu0 0
      %715 = vmatpush1.bf16.msra.mxu0 0
      %716 = vmatprep.subr.bf16.mxu0 0
      %717 = vmatpush1.bf16.msra.mxu0 0
      %718 = vmatprep.subr.bf16.mxu0 0
      %719 = vmatpush1.bf16.msra.mxu0 0
      %720 = vmatprep.subr.bf16.mxu0 0
      %721 = vmatpush1.bf16.msra.mxu0 0
      %722 = vmatprep.subr.bf16.mxu0 0
      %723 = vmatpush1.bf16.msra.mxu0 0
      %724 = vmatprep.subr.bf16.mxu0 0
      %725 = vmatpush1.bf16.msra.mxu0 0
      %726 = vmatprep.subr.bf16.mxu0 0
      %727 = vmatpush1.bf16.msra.mxu0 0
      %728 = vmatprep.subr.bf16.mxu0 0
      %729 = vmatpush1.bf16.msra.mxu0 0
      %730 = vmatprep.subr.bf16.mxu0 0
      %731 = vmatpush1.bf16.msra.mxu0 0
      %732 = vmatprep.subr.bf16.mxu0 0
      %733 = vmatpush1.bf16.msra.mxu0 0
      %734 = vmatprep.mubr.bf16.mxu0 0
      %735 = vmatmul.mubr.bf16.gmra.mrb[0].mxu0 %v691
      %v736 = vpop.f32.mrb[0].mxu0
      %v737 = vadd.f32 %v676, %v736
      %v738 = vpop.f32.mrb[0].mxu0
      %v739 = vpop.f32.mrb[0].mxu0
      %v740 = vadd.f32 %v676, %v739
      %v741 = vpop.f32.mrb[0].mxu0
      %742 = vmatprep.mubr.bf16.mxu0 0
      %743 = vmatmul.mubr.bf16.gmra.mrb[0].mxu0 %v694
      %v744 = vpop.f32.mrb[0].mxu0
      %v745 = vadd.f32 %v676, %v744
      %v746 = vpop.f32.mrb[0].mxu0
      %v747 = vpop.f32.mrb[0].mxu0
      %v748 = vadd.f32 %v676, %v747
      %v749 = vpop.f32.mrb[0].mxu0
      %750 = vmatprep.mubr.bf16.mxu0 0
      %751 = vmatmul.mubr.bf16.gmra.mrb[0].mxu0 %v697
      %v752 = vpop.f32.mrb[0].mxu0
      %v753 = vadd.f32 %v676, %v752
      %v754 = vpop.f32.mrb[0].mxu0
      %v755 = vpop.f32.mrb[0].mxu0
      %v756 = vadd.f32 %v676, %v755
      %v757 = vpop.f32.mrb[0].mxu0
      %758 = vmatprep.mubr.bf16.mxu0 0
      %759 = vmatmul.mubr.bf16.gmra.mrb[0].mxu0 %v700
      %v760 = vpop.f32.mrb[0].mxu0
      %v761 = vadd.f32 %v676, %v760
      %v762 = vpop.f32.mrb[0].mxu0
      %v763 = vpop.f32.mrb[0].mxu0
      %v764 = vadd.f32 %v676, %v763
      %v765 = vpop.f32.mrb[0].mxu0
      %766 = vdwg.mxu0
      %v767 = vtanh.pop %v737
      %v768 = vtanh.pop %v740
      %v769 = vtanh.pop %v745
      %v770 = vtanh.pop %v748
      %v771 = vtanh.pop %v753
      %v772 = vtanh.pop %v756
      %v773 = vtanh.pop %v761
      %v774 = vtanh.pop %v764
      %v775 = vmul.f32 %v737, 0.5
      %v776 = vmul.f32 %v740, 0.5
      %v777 = vmul.f32 %v745, 0.5
      %v778 = vmul.f32 %v748, 0.5
      %v779 = vmul.f32 %v753, 0.5
      %v780 = vmul.f32 %v756, 0.5
      %v781 = vmul.f32 %v761, 0.5
      %v782 = vmul.f32 %v764, 0.5
      %v783 = vtanh.pop %v775
      %v784 = vtanh.pop %v776
      %v785 = vtanh.pop %v777
      %v786 = vtanh.pop %v778
      %v787 = vtanh.pop %v779
      %v788 = vtanh.pop %v780
      %v789 = vtanh.pop %v781
      %v790 = vtanh.pop %v782
      %v791 = vadd.f32 %v783, 1.0
      %v792 = vadd.f32 %v784, 1.0
      %v793 = vadd.f32 %v785, 1.0
      %v794 = vadd.f32 %v786, 1.0
      %v795 = vadd.f32 %v787, 1.0
      %v796 = vadd.f32 %v788, 1.0
      %v797 = vadd.f32 %v789, 1.0
      %v798 = vadd.f32 %v790, 1.0
      %v799 = vmul.f32 %v791, 0.5
      %v800 = vmul.f32 %v792, 0.5
      %v801 = vmul.f32 %v793, 0.5
      %v802 = vmul.f32 %v794, 0.5
      %v803 = vmul.f32 %v795, 0.5
      %v804 = vmul.f32 %v796, 0.5
      %v805 = vmul.f32 %v797, 0.5
      %v806 = vmul.f32 %v798, 0.5
      %815 = vrot.lane.b32.xlu0 %v799, 112
      %v816 = vpop.permute.xlu0 %815
      %817 = vrot.lane.b32.xlu0 %v800, 112
      %v818 = vpop.permute.xlu0 %817
      %819 = vrot.lane.b32.xlu0 %v801, 112
      %v820 = vpop.permute.xlu0 %819
      %821 = vrot.lane.b32.xlu0 %v802, 112
      %v822 = vpop.permute.xlu0 %821
      %823 = vrot.lane.b32.xlu0 %v803, 112
      %v824 = vpop.permute.xlu0 %823
      %825 = vrot.lane.b32.xlu0 %v804, 112
      %v826 = vpop.permute.xlu0 %825
      %827 = vrot.lane.b32.xlu0 %v805, 112
      %v828 = vpop.permute.xlu0 %827
      %829 = vrot.lane.b32.xlu0 %v806, 112
      %v830 = vpop.permute.xlu0 %829
      %v839 = vmul.f32 %v767, %v816
      %v840 = vmul.f32 %v768, %v818
      %v841 = vmul.f32 %v769, %v820
      %v842 = vmul.f32 %v770, %v822
      %v843 = vmul.f32 %v771, %v824
      %v844 = vmul.f32 %v772, %v826
      %v845 = vmul.f32 %v773, %v828
      %v846 = vmul.f32 %v774, %v830
      %v847 = vpack.c.bf16 %v840, %v839
      %v848 = vpack.c.bf16 %v842, %v841
      %v849 = vpack.c.bf16 %v844, %v843
      %v850 = vpack.c.bf16 %v846, %v845
      %s851 = scalar_lea.vmem %s3, 8
      %v852 = vld [vmem:[%s851] sm:$0xf]
      %v853 = vld [vmem:[%s851 + $0x4] sm:$0xf]
      %s854 = scalar_lea.vmem %s4, 1
      %v855 = vld [vmem:[%s854] sm:$0x1]
      %v857 = vlaneseq
      %v858 = vshrl.u32 %v857, 7
      %v859 = vsub.s32 0, %v858
      %v860 = vrot.slane %v855, %v859
      %v864 = vunpack.c.l.b16 %v852
      %v865 = vunpack.c.l.b16 %v853
      %v866 = vpack.c.b16 %v865, %v864
      %v869 = vsel %vm226, %v847, 0
      %v872 = vsel %vm226, %v848, 0
      %v875 = vsel %vm226, %v849, 0
      %v878 = vsel %vm226, %v850, 0
      %880 = vmatprep.subr.bf16.mxu0 0
      %881 = vmatpush1.bf16.msra.mxu0 %v866
      %882 = vmatprep.subr.bf16.mxu0 0
      %883 = vmatpush1.bf16.msra.mxu0 0
      %884 = vmatprep.subr.bf16.mxu0 0
      %885 = vmatpush1.bf16.msra.mxu0 0
      %886 = vmatprep.subr.bf16.mxu0 0
      %887 = vmatpush1.bf16.msra.mxu0 0
      %888 = vmatprep.subr.bf16.mxu0 0
      %889 = vmatpush1.bf16.msra.mxu0 0
      %890 = vmatprep.subr.bf16.mxu0 0
      %891 = vmatpush1.bf16.msra.mxu0 0
      %892 = vmatprep.subr.bf16.mxu0 0
      %893 = vmatpush1.bf16.msra.mxu0 0
      %894 = vmatprep.subr.bf16.mxu0 0
      %895 = vmatpush1.bf16.msra.mxu0 0
      %896 = vmatprep.subr.bf16.mxu0 0
      %897 = vmatpush1.bf16.msra.mxu0 0
      %898 = vmatprep.subr.bf16.mxu0 0
      %899 = vmatpush1.bf16.msra.mxu0 0
      %900 = vmatprep.subr.bf16.mxu0 0
      %901 = vmatpush1.bf16.msra.mxu0 0
      %902 = vmatprep.subr.bf16.mxu0 0
      %903 = vmatpush1.bf16.msra.mxu0 0
      %904 = vmatprep.subr.bf16.mxu0 0
      %905 = vmatpush1.bf16.msra.mxu0 0
      %906 = vmatprep.subr.bf16.mxu0 0
      %907 = vmatpush1.bf16.msra.mxu0 0
      %908 = vmatprep.subr.bf16.mxu0 0
      %909 = vmatpush1.bf16.msra.mxu0 0
      %910 = vmatprep.subr.bf16.mxu0 0
      %911 = vmatpush1.bf16.msra.mxu0 0
      %912 = vmatprep.mubr.bf16.mxu0 0
      %913 = vmatmul.mubr.bf16.gmra.mrb[0].mxu0 %v869
      %v914 = vpop.f32.mrb[0].mxu0
      %v915 = vadd.f32 %v860, %v914
      %v916 = vpop.f32.mrb[0].mxu0
      %v917 = vpop.f32.mrb[0].mxu0
      %v918 = vadd.f32 %v860, %v917
      %v919 = vpop.f32.mrb[0].mxu0
      %920 = vmatprep.mubr.bf16.mxu0 0
      %921 = vmatmul.mubr.bf16.gmra.mrb[0].mxu0 %v872
      %v922 = vpop.f32.mrb[0].mxu0
      %v923 = vadd.f32 %v860, %v922
      %v924 = vpop.f32.mrb[0].mxu0
      %v925 = vpop.f32.mrb[0].mxu0
      %v926 = vadd.f32 %v860, %v925
      %v927 = vpop.f32.mrb[0].mxu0
      %928 = vmatprep.mubr.bf16.mxu0 0
      %929 = vmatmul.mubr.bf16.gmra.mrb[0].mxu0 %v875
      %v930 = vpop.f32.mrb[0].mxu0
      %v931 = vadd.f32 %v860, %v930
      %v932 = vpop.f32.mrb[0].mxu0
      %v933 = vpop.f32.mrb[0].mxu0
      %v934 = vadd.f32 %v860, %v933
      %v935 = vpop.f32.mrb[0].mxu0
      %936 = vmatprep.mubr.bf16.mxu0 0
      %937 = vmatmul.mubr.bf16.gmra.mrb[0].mxu0 %v878
      %v938 = vpop.f32.mrb[0].mxu0
      %v939 = vadd.f32 %v860, %v938
      %v940 = vpop.f32.mrb[0].mxu0
      %v941 = vpop.f32.mrb[0].mxu0
      %v942 = vadd.f32 %v860, %v941
      %v943 = vpop.f32.mrb[0].mxu0
      %944 = vdwg.mxu0
      %v945 = vadd.f32 %v605, %v915
      %v946 = vadd.f32 %v606, %v918
      %v947 = vadd.f32 %v607, %v923
      %v948 = vadd.f32 %v608, %v926
      %v949 = vadd.f32 %v609, %v931
      %v950 = vadd.f32 %v610, %v934
      %v951 = vadd.f32 %v611, %v939
      %v952 = vadd.f32 %v612, %v942
      %953 = vst.msk [vmem:[#allocation2 + $0x8] sm:$0xff] %vm226, %v945
      %954 = vst.msk [vmem:[#allocation2 + $0x10] sm:$0xff] %vm226, %v946
      %955 = vst.msk [vmem:[#allocation2 + $0x18] sm:$0xff] %vm226, %v947
      %956 = vst.msk [vmem:[#allocation2 + $0x20] sm:$0xff] %vm226, %v948
      %957 = vst.msk [vmem:[#allocation2 + $0x28] sm:$0xff] %vm226, %v949
      %958 = vst.msk [vmem:[#allocation2 + $0x30] sm:$0xff] %vm226, %v950
      %959 = vst.msk [vmem:[#allocation2 + $0x38] sm:$0xff] %vm226, %v951
      %960 = vst.msk [vmem:[#allocation2 + $0x40] sm:$0xff] %vm226, %v952
      %v961 = vadd.f32 %v597, %v915
      %v962 = vadd.f32 %v598, %v918
      %v963 = vadd.f32 %v599, %v923
      %v964 = vadd.f32 %v600, %v926
      %v965 = vadd.f32 %v601, %v931
      %v966 = vadd.f32 %v602, %v934
      %v967 = vadd.f32 %v603, %v939
      %v968 = vadd.f32 %v604, %v942
      %v969 = vld [vmem:[#allocation2 + $0x8] sm:$0xff]
      %v970 = vld [vmem:[#allocation2 + $0x10] sm:$0xff]
      %v971 = vld [vmem:[#allocation2 + $0x18] sm:$0xff]
      %v972 = vld [vmem:[#allocation2 + $0x20] sm:$0xff]
      %v973 = vld [vmem:[#allocation2 + $0x28] sm:$0xff]
      %v974 = vld [vmem:[#allocation2 + $0x30] sm:$0xff]
      %v975 = vld [vmem:[#allocation2 + $0x38] sm:$0xff]
      %v976 = vld [vmem:[#allocation2 + $0x40] sm:$0xff]
      %v977 = vld [vmem:[#allocation2 + $0x4] sm:$0xff]
      %v978 = vld [vmem:[#allocation2 + $0xc] sm:$0xff]
      %v979 = vld [vmem:[#allocation2 + $0x14] sm:$0xff]
      %v980 = vld [vmem:[#allocation2 + $0x1c] sm:$0xff]
      %v981 = vld [vmem:[#allocation2 + $0x24] sm:$0xff]
      %v982 = vld [vmem:[#allocation2 + $0x2c] sm:$0xff]
      %v983 = vld [vmem:[#allocation2 + $0x34] sm:$0xff]
      %v984 = vld [vmem:[#allocation2 + $0x3c] sm:$0xff]
      %993 = vrot.lane.b32.xlu0 %v969, 16
      %v994 = vpop.permute.xlu0 %993
      %995 = vrot.lane.b32.xlu0 %v970, 16
      %v996 = vpop.permute.xlu0 %995
      %997 = vrot.lane.b32.xlu0 %v971, 16
      %v998 = vpop.permute.xlu0 %997
      %999 = vrot.lane.b32.xlu0 %v972, 16
      %v1000 = vpop.permute.xlu0 %999
      %1001 = vrot.lane.b32.xlu0 %v973, 16
      %v1002 = vpop.permute.xlu0 %1001
      %1003 = vrot.lane.b32.xlu0 %v974, 16
      %v1004 = vpop.permute.xlu0 %1003
      %1005 = vrot.lane.b32.xlu0 %v975, 16
      %v1006 = vpop.permute.xlu0 %1005
      %1007 = vrot.lane.b32.xlu0 %v976, 16
      %v1008 = vpop.permute.xlu0 %1007
      %v1017 = vsel %vm226, %v977, %v994
      %v1018 = vsel %vm226, %v978, %v996
      %v1019 = vsel %vm226, %v979, %v998
      %v1020 = vsel %vm226, %v980, %v1000
      %v1021 = vsel %vm226, %v981, %v1002
      %v1022 = vsel %vm226, %v982, %v1004
      %v1023 = vsel %vm226, %v983, %v1006
      %v1024 = vsel %vm226, %v984, %v1008
      %v1025 = vpack.c.bf16 %v1018, %v1017
      %v1026 = vpack.c.bf16 %v1020, %v1019
      %v1027 = vpack.c.bf16 %v1022, %v1021
      %v1028 = vpack.c.bf16 %v1024, %v1023
      %s1029 = scalar_lea.vmem %s1, 32
      %v1030 = vld [vmem:[%s1029] sm:$0xf]
      %v1031 = vld [vmem:[%s1029 + $0x4] sm:$0xf]
      %v1032 = vld [vmem:[%s1029 + $0x8] sm:$0xf]
      %v1033 = vld [vmem:[%s1029 + $0xc] sm:$0xf]
      %s1034 = scalar_lea.vmem %s2, 2
      %v1035 = vld [vmem:[%s1034] sm:$0x1]
      %v1037 = vlaneseq
      %v1038 = vshrl.u32 %v1037, 7
      %v1039 = vsub.s32 0, %v1038
      %v1040 = vrot.slane %v1035, %v1039
      %v1046 = vunpack.c.l.b16 %v1030
      %v1047 = vunpack.c.l.b16 %v1031
      %v1048 = vunpack.c.l.b16 %v1032
      %v1049 = vunpack.c.l.b16 %v1033
      %v1050 = vpack.c.b16 %v1047, %v1046
      %v1051 = vpack.c.b16 %v1049, %v1048
      %v1055 = vsel %vm327, %v1025, 0
      %v1058 = vsel %vm327, %v1026, 0
      %v1061 = vsel %vm327, %v1027, 0
      %v1064 = vsel %vm327, %v1028, 0
      %1066 = vmatprep.subr.bf16.mxu0 0
      %1067 = vmatpush1.bf16.msra.mxu0 %v1050
      %1068 = vmatprep.subr.bf16.mxu0 0
      %1069 = vmatpush1.bf16.msra.mxu0 %v1051
      %1070 = vmatprep.subr.bf16.mxu0 0
      %1071 = vmatpush1.bf16.msra.mxu0 0
      %1072 = vmatprep.subr.bf16.mxu0 0
      %1073 = vmatpush1.bf16.msra.mxu0 0
      %1074 = vmatprep.subr.bf16.mxu0 0
      %1075 = vmatpush1.bf16.msra.mxu0 0
      %1076 = vmatprep.subr.bf16.mxu0 0
      %1077 = vmatpush1.bf16.msra.mxu0 0
      %1078 = vmatprep.subr.bf16.mxu0 0
      %1079 = vmatpush1.bf16.msra.mxu0 0
      %1080 = vmatprep.subr.bf16.mxu0 0
      %1081 = vmatpush1.bf16.msra.mxu0 0
      %1082 = vmatprep.subr.bf16.mxu0 0
      %1083 = vmatpush1.bf16.msra.mxu0 0
      %1084 = vmatprep.subr.bf16.mxu0 0
      %1085 = vmatpush1.bf16.msra.mxu0 0
      %1086 = vmatprep.subr.bf16.mxu0 0
      %1087 = vmatpush1.bf16.msra.mxu0 0
      %1088 = vmatprep.subr.bf16.mxu0 0
      %1089 = vmatpush1.bf16.msra.mxu0 0
      %1090 = vmatprep.subr.bf16.mxu0 0
      %1091 = vmatpush1.bf16.msra.mxu0 0
      %1092 = vmatprep.subr.bf16.mxu0 0
      %1093 = vmatpush1.bf16.msra.mxu0 0
      %1094 = vmatprep.subr.bf16.mxu0 0
      %1095 = vmatpush1.bf16.msra.mxu0 0
      %1096 = vmatprep.subr.bf16.mxu0 0
      %1097 = vmatpush1.bf16.msra.mxu0 0
      %1098 = vmatprep.mubr.bf16.mxu0 0
      %1099 = vmatmul.mubr.bf16.gmra.mrb[0].mxu0 %v1055
      %v1100 = vpop.f32.mrb[0].mxu0
      %v1101 = vadd.f32 %v1040, %v1100
      %v1102 = vpop.f32.mrb[0].mxu0
      %v1103 = vpop.f32.mrb[0].mxu0
      %v1104 = vadd.f32 %v1040, %v1103
      %v1105 = vpop.f32.mrb[0].mxu0
      %1106 = vmatprep.mubr.bf16.mxu0 0
      %1107 = vmatmul.mubr.bf16.gmra.mrb[0].mxu0 %v1058
      %v1108 = vpop.f32.mrb[0].mxu0
      %v1109 = vadd.f32 %v1040, %v1108
      %v1110 = vpop.f32.mrb[0].mxu0
      %v1111 = vpop.f32.mrb[0].mxu0
      %v1112 = vadd.f32 %v1040, %v1111
      %v1113 = vpop.f32.mrb[0].mxu0
      %1114 = vmatprep.mubr.bf16.mxu0 0
      %1115 = vmatmul.mubr.bf16.gmra.mrb[0].mxu0 %v1061
      %v1116 = vpop.f32.mrb[0].mxu0
      %v1117 = vadd.f32 %v1040, %v1116
      %v1118 = vpop.f32.mrb[0].mxu0
      %v1119 = vpop.f32.mrb[0].mxu0
      %v1120 = vadd.f32 %v1040, %v1119
      %v1121 = vpop.f32.mrb[0].mxu0
      %1122 = vmatprep.mubr.bf16.mxu0 0
      %1123 = vmatmul.mubr.bf16.gmra.mrb[0].mxu0 %v1064
      %v1124 = vpop.f32.mrb[0].mxu0
      %v1125 = vadd.f32 %v1040, %v1124
      %v1126 = vpop.f32.mrb[0].mxu0
      %v1127 = vpop.f32.mrb[0].mxu0
      %v1128 = vadd.f32 %v1040, %v1127
      %v1129 = vpop.f32.mrb[0].mxu0
      %1130 = vdwg.mxu0
      %v1131 = vtanh.pop %v1101
      %v1132 = vtanh.pop %v1104
      %v1133 = vtanh.pop %v1109
      %v1134 = vtanh.pop %v1112
      %v1135 = vtanh.pop %v1117
      %v1136 = vtanh.pop %v1120
      %v1137 = vtanh.pop %v1125
      %v1138 = vtanh.pop %v1128
      %v1139 = vmul.f32 %v1101, 0.5
      %v1140 = vmul.f32 %v1104, 0.5
      %v1141 = vmul.f32 %v1109, 0.5
      %v1142 = vmul.f32 %v1112, 0.5
      %v1143 = vmul.f32 %v1117, 0.5
      %v1144 = vmul.f32 %v1120, 0.5
      %v1145 = vmul.f32 %v1125, 0.5
      %v1146 = vmul.f32 %v1128, 0.5
      %v1147 = vtanh.pop %v1139
      %v1148 = vtanh.pop %v1140
      %v1149 = vtanh.pop %v1141
      %v1150 = vtanh.pop %v1142
      %v1151 = vtanh.pop %v1143
      %v1152 = vtanh.pop %v1144
      %v1153 = vtanh.pop %v1145
      %v1154 = vtanh.pop %v1146
      %v1155 = vadd.f32 %v1147, 1.0
      %v1156 = vadd.f32 %v1148, 1.0
      %v1157 = vadd.f32 %v1149, 1.0
      %v1158 = vadd.f32 %v1150, 1.0
      %v1159 = vadd.f32 %v1151, 1.0
      %v1160 = vadd.f32 %v1152, 1.0
      %v1161 = vadd.f32 %v1153, 1.0
      %v1162 = vadd.f32 %v1154, 1.0
      %v1163 = vmul.f32 %v1155, 0.5
      %v1164 = vmul.f32 %v1156, 0.5
      %v1165 = vmul.f32 %v1157, 0.5
      %v1166 = vmul.f32 %v1158, 0.5
      %v1167 = vmul.f32 %v1159, 0.5
      %v1168 = vmul.f32 %v1160, 0.5
      %v1169 = vmul.f32 %v1161, 0.5
      %v1170 = vmul.f32 %v1162, 0.5
      %1179 = vrot.lane.b32.xlu0 %v1163, 112
      %v1180 = vpop.permute.xlu0 %1179
      %1181 = vrot.lane.b32.xlu0 %v1164, 112
      %v1182 = vpop.permute.xlu0 %1181
      %1183 = vrot.lane.b32.xlu0 %v1165, 112
      %v1184 = vpop.permute.xlu0 %1183
      %1185 = vrot.lane.b32.xlu0 %v1166, 112
      %v1186 = vpop.permute.xlu0 %1185
      %1187 = vrot.lane.b32.xlu0 %v1167, 112
      %v1188 = vpop.permute.xlu0 %1187
      %1189 = vrot.lane.b32.xlu0 %v1168, 112
      %v1190 = vpop.permute.xlu0 %1189
      %1191 = vrot.lane.b32.xlu0 %v1169, 112
      %v1192 = vpop.permute.xlu0 %1191
      %1193 = vrot.lane.b32.xlu0 %v1170, 112
      %v1194 = vpop.permute.xlu0 %1193
      %v1203 = vmul.f32 %v1131, %v1180
      %v1204 = vmul.f32 %v1132, %v1182
      %v1205 = vmul.f32 %v1133, %v1184
      %v1206 = vmul.f32 %v1134, %v1186
      %v1207 = vmul.f32 %v1135, %v1188
      %v1208 = vmul.f32 %v1136, %v1190
      %v1209 = vmul.f32 %v1137, %v1192
      %v1210 = vmul.f32 %v1138, %v1194
      %v1211 = vpack.c.bf16 %v1204, %v1203
      %v1212 = vpack.c.bf16 %v1206, %v1205
      %v1213 = vpack.c.bf16 %v1208, %v1207
      %v1214 = vpack.c.bf16 %v1210, %v1209
      %s1215 = scalar_lea.vmem %s3, 16
      %v1216 = vld [vmem:[%s1215] sm:$0xf]
      %v1217 = vld [vmem:[%s1215 + $0x4] sm:$0xf]
      %s1218 = scalar_lea.vmem %s4, 2
      %v1219 = vld [vmem:[%s1218] sm:$0x1]
      %v1221 = vlaneseq
      %v1222 = vshrl.u32 %v1221, 7
      %v1223 = vsub.s32 0, %v1222
      %v1224 = vrot.slane %v1219, %v1223
      %v1228 = vunpack.c.l.b16 %v1216
      %v1229 = vunpack.c.l.b16 %v1217
      %v1230 = vpack.c.b16 %v1229, %v1228
      %v1233 = vsel %vm226, %v1211, 0
      %v1236 = vsel %vm226, %v1212, 0
      %v1239 = vsel %vm226, %v1213, 0
      %v1242 = vsel %vm226, %v1214, 0
      %1244 = vmatprep.subr.bf16.mxu0 0
      %1245 = vmatpush1.bf16.msra.mxu0 %v1230
      %1246 = vmatprep.subr.bf16.mxu0 0
      %1247 = vmatpush1.bf16.msra.mxu0 0
      %1248 = vmatprep.subr.bf16.mxu0 0
      %1249 = vmatpush1.bf16.msra.mxu0 0
      %1250 = vmatprep.subr.bf16.mxu0 0
      %1251 = vmatpush1.bf16.msra.mxu0 0
      %1252 = vmatprep.subr.bf16.mxu0 0
      %1253 = vmatpush1.bf16.msra.mxu0 0
      %1254 = vmatprep.subr.bf16.mxu0 0
      %1255 = vmatpush1.bf16.msra.mxu0 0
      %1256 = vmatprep.subr.bf16.mxu0 0
      %1257 = vmatpush1.bf16.msra.mxu0 0
      %1258 = vmatprep.subr.bf16.mxu0 0
      %1259 = vmatpush1.bf16.msra.mxu0 0
      %1260 = vmatprep.subr.bf16.mxu0 0
      %1261 = vmatpush1.bf16.msra.mxu0 0
      %1262 = vmatprep.subr.bf16.mxu0 0
      %1263 = vmatpush1.bf16.msra.mxu0 0
      %1264 = vmatprep.subr.bf16.mxu0 0
      %1265 = vmatpush1.bf16.msra.mxu0 0
      %1266 = vmatprep.subr.bf16.mxu0 0
      %1267 = vmatpush1.bf16.msra.mxu0 0
      %1268 = vmatprep.subr.bf16.mxu0 0
      %1269 = vmatpush1.bf16.msra.mxu0 0
      %1270 = vmatprep.subr.bf16.mxu0 0
      %1271 = vmatpush1.bf16.msra.mxu0 0
      %1272 = vmatprep.subr.bf16.mxu0 0
      %1273 = vmatpush1.bf16.msra.mxu0 0
      %1274 = vmatprep.subr.bf16.mxu0 0
      %1275 = vmatpush1.bf16.msra.mxu0 0
      %1276 = vmatprep.mubr.bf16.mxu0 0
      %1277 = vmatmul.mubr.bf16.gmra.mrb[0].mxu0 %v1233
      %v1278 = vpop.f32.mrb[0].mxu0
      %v1279 = vadd.f32 %v1224, %v1278
      %v1280 = vpop.f32.mrb[0].mxu0
      %v1281 = vpop.f32.mrb[0].mxu0
      %v1282 = vadd.f32 %v1224, %v1281
      %v1283 = vpop.f32.mrb[0].mxu0
      %1284 = vmatprep.mubr.bf16.mxu0 0
      %1285 = vmatmul.mubr.bf16.gmra.mrb[0].mxu0 %v1236
      %v1286 = vpop.f32.mrb[0].mxu0
      %v1287 = vadd.f32 %v1224, %v1286
      %v1288 = vpop.f32.mrb[0].mxu0
      %v1289 = vpop.f32.mrb[0].mxu0
      %v1290 = vadd.f32 %v1224, %v1289
      %v1291 = vpop.f32.mrb[0].mxu0
      %1292 = vmatprep.mubr.bf16.mxu0 0
      %1293 = vmatmul.mubr.bf16.gmra.mrb[0].mxu0 %v1239
      %v1294 = vpop.f32.mrb[0].mxu0
      %v1295 = vadd.f32 %v1224, %v1294
      %v1296 = vpop.f32.mrb[0].mxu0
      %v1297 = vpop.f32.mrb[0].mxu0
      %v1298 = vadd.f32 %v1224, %v1297
      %v1299 = vpop.f32.mrb[0].mxu0
      %1300 = vmatprep.mubr.bf16.mxu0 0
      %1301 = vmatmul.mubr.bf16.gmra.mrb[0].mxu0 %v1242
      %v1302 = vpop.f32.mrb[0].mxu0
      %v1303 = vadd.f32 %v1224, %v1302
      %v1304 = vpop.f32.mrb[0].mxu0
      %v1305 = vpop.f32.mrb[0].mxu0
      %v1306 = vadd.f32 %v1224, %v1305
      %v1307 = vpop.f32.mrb[0].mxu0
      %1308 = vdwg.mxu0
      %v1309 = vadd.f32 %v969, %v1279
      %v1310 = vadd.f32 %v970, %v1282
      %v1311 = vadd.f32 %v971, %v1287
      %v1312 = vadd.f32 %v972, %v1290
      %v1313 = vadd.f32 %v973, %v1295
      %v1314 = vadd.f32 %v974, %v1298
      %v1315 = vadd.f32 %v975, %v1303
      %v1316 = vadd.f32 %v976, %v1306
      %1317 = vst.msk [vmem:[#allocation2 + $0x8] sm:$0xff] %vm226, %v1309
      %1318 = vst.msk [vmem:[#allocation2 + $0x10] sm:$0xff] %vm226, %v1310
      %1319 = vst.msk [vmem:[#allocation2 + $0x18] sm:$0xff] %vm226, %v1311
      %1320 = vst.msk [vmem:[#allocation2 + $0x20] sm:$0xff] %vm226, %v1312
      %1321 = vst.msk [vmem:[#allocation2 + $0x28] sm:$0xff] %vm226, %v1313
      %1322 = vst.msk [vmem:[#allocation2 + $0x30] sm:$0xff] %vm226, %v1314
      %1323 = vst.msk [vmem:[#allocation2 + $0x38] sm:$0xff] %vm226, %v1315
      %1324 = vst.msk [vmem:[#allocation2 + $0x40] sm:$0xff] %vm226, %v1316
      %v1325 = vadd.f32 %v961, %v1279
      %v1326 = vadd.f32 %v962, %v1282
      %v1327 = vadd.f32 %v963, %v1287
      %v1328 = vadd.f32 %v964, %v1290
      %v1329 = vadd.f32 %v965, %v1295
      %v1330 = vadd.f32 %v966, %v1298
      %v1331 = vadd.f32 %v967, %v1303
      %v1332 = vadd.f32 %v968, %v1306
      %v1333 = vld [vmem:[#allocation2 + $0x8] sm:$0xff]
      %v1334 = vld [vmem:[#allocation2 + $0x10] sm:$0xff]
      %v1335 = vld [vmem:[#allocation2 + $0x18] sm:$0xff]
      %v1336 = vld [vmem:[#allocation2 + $0x20] sm:$0xff]
      %v1337 = vld [vmem:[#allocation2 + $0x28] sm:$0xff]
      %v1338 = vld [vmem:[#allocation2 + $0x30] sm:$0xff]
      %v1339 = vld [vmem:[#allocation2 + $0x38] sm:$0xff]
      %v1340 = vld [vmem:[#allocation2 + $0x40] sm:$0xff]
      %v1341 = vld [vmem:[#allocation2 + $0x7] sm:$0xff]
      %v1342 = vld [vmem:[#allocation2 + $0xf] sm:$0xff]
      %v1343 = vld [vmem:[#allocation2 + $0x17] sm:$0xff]
      %v1344 = vld [vmem:[#allocation2 + $0x1f] sm:$0xff]
      %v1345 = vld [vmem:[#allocation2 + $0x27] sm:$0xff]
      %v1346 = vld [vmem:[#allocation2 + $0x2f] sm:$0xff]
      %v1347 = vld [vmem:[#allocation2 + $0x37] sm:$0xff]
      %v1348 = vld [vmem:[#allocation2 + $0x3f] sm:$0xff]
      %1357 = vrot.lane.b32.xlu0 %v1333, 16
      %v1358 = vpop.permute.xlu0 %1357
      %1359 = vrot.lane.b32.xlu0 %v1334, 16
      %v1360 = vpop.permute.xlu0 %1359
      %1361 = vrot.lane.b32.xlu0 %v1335, 16
      %v1362 = vpop.permute.xlu0 %1361
      %1363 = vrot.lane.b32.xlu0 %v1336, 16
      %v1364 = vpop.permute.xlu0 %1363
      %1365 = vrot.lane.b32.xlu0 %v1337, 16
      %v1366 = vpop.permute.xlu0 %1365
      %1367 = vrot.lane.b32.xlu0 %v1338, 16
      %v1368 = vpop.permute.xlu0 %1367
      %1369 = vrot.lane.b32.xlu0 %v1339, 16
      %v1370 = vpop.permute.xlu0 %1369
      %1371 = vrot.lane.b32.xlu0 %v1340, 16
      %v1372 = vpop.permute.xlu0 %1371
      %v1381 = vsel %vm226, %v1341, %v1358
      %v1382 = vsel %vm226, %v1342, %v1360
      %v1383 = vsel %vm226, %v1343, %v1362
      %v1384 = vsel %vm226, %v1344, %v1364
      %v1385 = vsel %vm226, %v1345, %v1366
      %v1386 = vsel %vm226, %v1346, %v1368
      %v1387 = vsel %vm226, %v1347, %v1370
      %v1388 = vsel %vm226, %v1348, %v1372
      %v1389 = vpack.c.bf16 %v1382, %v1381
      %v1390 = vpack.c.bf16 %v1384, %v1383
      %v1391 = vpack.c.bf16 %v1386, %v1385
      %v1392 = vpack.c.bf16 %v1388, %v1387
      %s1393 = scalar_lea.vmem %s1, 48
      %v1394 = vld [vmem:[%s1393] sm:$0xf]
      %v1395 = vld [vmem:[%s1393 + $0x4] sm:$0xf]
      %v1396 = vld [vmem:[%s1393 + $0x8] sm:$0xf]
      %v1397 = vld [vmem:[%s1393 + $0xc] sm:$0xf]
      %s1398 = scalar_lea.vmem %s2, 3
      %v1399 = vld [vmem:[%s1398] sm:$0x1]
      %v1401 = vlaneseq
      %v1402 = vshrl.u32 %v1401, 7
      %v1403 = vsub.s32 0, %v1402
      %v1404 = vrot.slane %v1399, %v1403
      %v1410 = vunpack.c.l.b16 %v1394
      %v1411 = vunpack.c.l.b16 %v1395
      %v1412 = vunpack.c.l.b16 %v1396
      %v1413 = vunpack.c.l.b16 %v1397
      %v1414 = vpack.c.b16 %v1411, %v1410
      %v1415 = vpack.c.b16 %v1413, %v1412
      %v1419 = vsel %vm327, %v1389, 0
      %v1422 = vsel %vm327, %v1390, 0
      %v1425 = vsel %vm327, %v1391, 0
      %v1428 = vsel %vm327, %v1392, 0
      %1430 = vmatprep.subr.bf16.mxu0 0
      %1431 = vmatpush1.bf16.msra.mxu0 %v1414
      %1432 = vmatprep.subr.bf16.mxu0 0
      %1433 = vmatpush1.bf16.msra.mxu0 %v1415
      %1434 = vmatprep.subr.bf16.mxu0 0
      %1435 = vmatpush1.bf16.msra.mxu0 0
      %1436 = vmatprep.subr.bf16.mxu0 0
      %1437 = vmatpush1.bf16.msra.mxu0 0
      %1438 = vmatprep.subr.bf16.mxu0 0
      %1439 = vmatpush1.bf16.msra.mxu0 0
      %1440 = vmatprep.subr.bf16.mxu0 0
      %1441 = vmatpush1.bf16.msra.mxu0 0
      %1442 = vmatprep.subr.bf16.mxu0 0
      %1443 = vmatpush1.bf16.msra.mxu0 0
      %1444 = vmatprep.subr.bf16.mxu0 0
      %1445 = vmatpush1.bf16.msra.mxu0 0
      %1446 = vmatprep.subr.bf16.mxu0 0
      %1447 = vmatpush1.bf16.msra.mxu0 0
      %1448 = vmatprep.subr.bf16.mxu0 0
      %1449 = vmatpush1.bf16.msra.mxu0 0
      %1450 = vmatprep.subr.bf16.mxu0 0
      %1451 = vmatpush1.bf16.msra.mxu0 0
      %1452 = vmatprep.subr.bf16.mxu0 0
      %1453 = vmatpush1.bf16.msra.mxu0 0
      %1454 = vmatprep.subr.bf16.mxu0 0
      %1455 = vmatpush1.bf16.msra.mxu0 0
      %1456 = vmatprep.subr.bf16.mxu0 0
      %1457 = vmatpush1.bf16.msra.mxu0 0
      %1458 = vmatprep.subr.bf16.mxu0 0
      %1459 = vmatpush1.bf16.msra.mxu0 0
      %1460 = vmatprep.subr.bf16.mxu0 0
      %1461 = vmatpush1.bf16.msra.mxu0 0
      %1462 = vmatprep.mubr.bf16.mxu0 0
      %1463 = vmatmul.mubr.bf16.gmra.mrb[0].mxu0 %v1419
      %v1464 = vpop.f32.mrb[0].mxu0
      %v1465 = vadd.f32 %v1404, %v1464
      %v1466 = vpop.f32.mrb[0].mxu0
      %v1467 = vpop.f32.mrb[0].mxu0
      %v1468 = vadd.f32 %v1404, %v1467
      %v1469 = vpop.f32.mrb[0].mxu0
      %1470 = vmatprep.mubr.bf16.mxu0 0
      %1471 = vmatmul.mubr.bf16.gmra.mrb[0].mxu0 %v1422
      %v1472 = vpop.f32.mrb[0].mxu0
      %v1473 = vadd.f32 %v1404, %v1472
      %v1474 = vpop.f32.mrb[0].mxu0
      %v1475 = vpop.f32.mrb[0].mxu0
      %v1476 = vadd.f32 %v1404, %v1475
      %v1477 = vpop.f32.mrb[0].mxu0
      %1478 = vmatprep.mubr.bf16.mxu0 0
      %1479 = vmatmul.mubr.bf16.gmra.mrb[0].mxu0 %v1425
      %v1480 = vpop.f32.mrb[0].mxu0
      %v1481 = vadd.f32 %v1404, %v1480
      %v1482 = vpop.f32.mrb[0].mxu0
      %v1483 = vpop.f32.mrb[0].mxu0
      %v1484 = vadd.f32 %v1404, %v1483
      %v1485 = vpop.f32.mrb[0].mxu0
      %1486 = vmatprep.mubr.bf16.mxu0 0
      %1487 = vmatmul.mubr.bf16.gmra.mrb[0].mxu0 %v1428
      %v1488 = vpop.f32.mrb[0].mxu0
      %v1489 = vadd.f32 %v1404, %v1488
      %v1490 = vpop.f32.mrb[0].mxu0
      %v1491 = vpop.f32.mrb[0].mxu0
      %v1492 = vadd.f32 %v1404, %v1491
      %v1493 = vpop.f32.mrb[0].mxu0
      %1494 = vdwg.mxu0
      %v1495 = vtanh.pop %v1465
      %v1496 = vtanh.pop %v1468
      %v1497 = vtanh.pop %v1473
      %v1498 = vtanh.pop %v1476
      %v1499 = vtanh.pop %v1481
      %v1500 = vtanh.pop %v1484
      %v1501 = vtanh.pop %v1489
      %v1502 = vtanh.pop %v1492
      %v1503 = vmul.f32 %v1465, 0.5
      %v1504 = vmul.f32 %v1468, 0.5
      %v1505 = vmul.f32 %v1473, 0.5
      %v1506 = vmul.f32 %v1476, 0.5
      %v1507 = vmul.f32 %v1481, 0.5
      %v1508 = vmul.f32 %v1484, 0.5
      %v1509 = vmul.f32 %v1489, 0.5
      %v1510 = vmul.f32 %v1492, 0.5
      %v1511 = vtanh.pop %v1503
      %v1512 = vtanh.pop %v1504
      %v1513 = vtanh.pop %v1505
      %v1514 = vtanh.pop %v1506
      %v1515 = vtanh.pop %v1507
      %v1516 = vtanh.pop %v1508
      %v1517 = vtanh.pop %v1509
      %v1518 = vtanh.pop %v1510
      %v1519 = vadd.f32 %v1511, 1.0
      %v1520 = vadd.f32 %v1512, 1.0
      %v1521 = vadd.f32 %v1513, 1.0
      %v1522 = vadd.f32 %v1514, 1.0
      %v1523 = vadd.f32 %v1515, 1.0
      %v1524 = vadd.f32 %v1516, 1.0
      %v1525 = vadd.f32 %v1517, 1.0
      %v1526 = vadd.f32 %v1518, 1.0
      %v1527 = vmul.f32 %v1519, 0.5
      %v1528 = vmul.f32 %v1520, 0.5
      %v1529 = vmul.f32 %v1521, 0.5
      %v1530 = vmul.f32 %v1522, 0.5
      %v1531 = vmul.f32 %v1523, 0.5
      %v1532 = vmul.f32 %v1524, 0.5
      %v1533 = vmul.f32 %v1525, 0.5
      %v1534 = vmul.f32 %v1526, 0.5
      %1543 = vrot.lane.b32.xlu0 %v1527, 112
      %v1544 = vpop.permute.xlu0 %1543
      %1545 = vrot.lane.b32.xlu0 %v1528, 112
      %v1546 = vpop.permute.xlu0 %1545
      %1547 = vrot.lane.b32.xlu0 %v1529, 112
      %v1548 = vpop.permute.xlu0 %1547
      %1549 = vrot.lane.b32.xlu0 %v1530, 112
      %v1550 = vpop.permute.xlu0 %1549
      %1551 = vrot.lane.b32.xlu0 %v1531, 112
      %v1552 = vpop.permute.xlu0 %1551
      %1553 = vrot.lane.b32.xlu0 %v1532, 112
      %v1554 = vpop.permute.xlu0 %1553
      %1555 = vrot.lane.b32.xlu0 %v1533, 112
      %v1556 = vpop.permute.xlu0 %1555
      %1557 = vrot.lane.b32.xlu0 %v1534, 112
      %v1558 = vpop.permute.xlu0 %1557
      %v1567 = vmul.f32 %v1495, %v1544
      %v1568 = vmul.f32 %v1496, %v1546
      %v1569 = vmul.f32 %v1497, %v1548
      %v1570 = vmul.f32 %v1498, %v1550
      %v1571 = vmul.f32 %v1499, %v1552
      %v1572 = vmul.f32 %v1500, %v1554
      %v1573 = vmul.f32 %v1501, %v1556
      %v1574 = vmul.f32 %v1502, %v1558
      %v1575 = vpack.c.bf16 %v1568, %v1567
      %v1576 = vpack.c.bf16 %v1570, %v1569
      %v1577 = vpack.c.bf16 %v1572, %v1571
      %v1578 = vpack.c.bf16 %v1574, %v1573
      %s1579 = scalar_lea.vmem %s3, 24
      %v1580 = vld [vmem:[%s1579] sm:$0xf]
      %v1581 = vld [vmem:[%s1579 + $0x4] sm:$0xf]
      %s1582 = scalar_lea.vmem %s4, 3
      %v1583 = vld [vmem:[%s1582] sm:$0x1]
      %v1585 = vlaneseq
      %v1586 = vshrl.u32 %v1585, 7
      %v1587 = vsub.s32 0, %v1586
      %v1588 = vrot.slane %v1583, %v1587
      %v1592 = vunpack.c.l.b16 %v1580
      %v1593 = vunpack.c.l.b16 %v1581
      %v1594 = vpack.c.b16 %v1593, %v1592
      %v1597 = vsel %vm226, %v1575, 0
      %v1600 = vsel %vm226, %v1576, 0
      %v1603 = vsel %vm226, %v1577, 0
      %v1606 = vsel %vm226, %v1578, 0
      %1608 = vmatprep.subr.bf16.mxu0 0
      %1609 = vmatpush1.bf16.msra.mxu0 %v1594
      %1610 = vmatprep.subr.bf16.mxu0 0
      %1611 = vmatpush1.bf16.msra.mxu0 0
      %1612 = vmatprep.subr.bf16.mxu0 0
      %1613 = vmatpush1.bf16.msra.mxu0 0
      %1614 = vmatprep.subr.bf16.mxu0 0
      %1615 = vmatpush1.bf16.msra.mxu0 0
      %1616 = vmatprep.subr.bf16.mxu0 0
      %1617 = vmatpush1.bf16.msra.mxu0 0
      %1618 = vmatprep.subr.bf16.mxu0 0
      %1619 = vmatpush1.bf16.msra.mxu0 0
      %1620 = vmatprep.subr.bf16.mxu0 0
      %1621 = vmatpush1.bf16.msra.mxu0 0
      %1622 = vmatprep.subr.bf16.mxu0 0
      %1623 = vmatpush1.bf16.msra.mxu0 0
      %1624 = vmatprep.subr.bf16.mxu0 0
      %1625 = vmatpush1.bf16.msra.mxu0 0
      %1626 = vmatprep.subr.bf16.mxu0 0
      %1627 = vmatpush1.bf16.msra.mxu0 0
      %1628 = vmatprep.subr.bf16.mxu0 0
      %1629 = vmatpush1.bf16.msra.mxu0 0
      %1630 = vmatprep.subr.bf16.mxu0 0
      %1631 = vmatpush1.bf16.msra.mxu0 0
      %1632 = vmatprep.subr.bf16.mxu0 0
      %1633 = vmatpush1.bf16.msra.mxu0 0
      %1634 = vmatprep.subr.bf16.mxu0 0
      %1635 = vmatpush1.bf16.msra.mxu0 0
      %1636 = vmatprep.subr.bf16.mxu0 0
      %1637 = vmatpush1.bf16.msra.mxu0 0
      %1638 = vmatprep.subr.bf16.mxu0 0
      %1639 = vmatpush1.bf16.msra.mxu0 0
      %1640 = vmatprep.mubr.bf16.mxu0 0
      %1641 = vmatmul.mubr.bf16.gmra.mrb[0].mxu0 %v1597
      %v1642 = vpop.f32.mrb[0].mxu0
      %v1643 = vadd.f32 %v1588, %v1642
      %v1644 = vpop.f32.mrb[0].mxu0
      %v1645 = vpop.f32.mrb[0].mxu0
      %v1646 = vadd.f32 %v1588, %v1645
      %v1647 = vpop.f32.mrb[0].mxu0
      %1648 = vmatprep.mubr.bf16.mxu0 0
      %1649 = vmatmul.mubr.bf16.gmra.mrb[0].mxu0 %v1600
      %v1650 = vpop.f32.mrb[0].mxu0
      %v1651 = vadd.f32 %v1588, %v1650
      %v1652 = vpop.f32.mrb[0].mxu0
      %v1653 = vpop.f32.mrb[0].mxu0
      %v1654 = vadd.f32 %v1588, %v1653
      %v1655 = vpop.f32.mrb[0].mxu0
      %1656 = vmatprep.mubr.bf16.mxu0 0
      %1657 = vmatmul.mubr.bf16.gmra.mrb[0].mxu0 %v1603
      %v1658 = vpop.f32.mrb[0].mxu0
      %v1659 = vadd.f32 %v1588, %v1658
      %v1660 = vpop.f32.mrb[0].mxu0
      %v1661 = vpop.f32.mrb[0].mxu0
      %v1662 = vadd.f32 %v1588, %v1661
      %v1663 = vpop.f32.mrb[0].mxu0
      %1664 = vmatprep.mubr.bf16.mxu0 0
      %1665 = vmatmul.mubr.bf16.gmra.mrb[0].mxu0 %v1606
      %v1666 = vpop.f32.mrb[0].mxu0
      %v1667 = vadd.f32 %v1588, %v1666
      %v1668 = vpop.f32.mrb[0].mxu0
      %v1669 = vpop.f32.mrb[0].mxu0
      %v1670 = vadd.f32 %v1588, %v1669
      %v1671 = vpop.f32.mrb[0].mxu0
      %1672 = vdwg.mxu0
      %v1673 = vadd.f32 %v1333, %v1643
      %v1674 = vadd.f32 %v1334, %v1646
      %v1675 = vadd.f32 %v1335, %v1651
      %v1676 = vadd.f32 %v1336, %v1654
      %v1677 = vadd.f32 %v1337, %v1659
      %v1678 = vadd.f32 %v1338, %v1662
      %v1679 = vadd.f32 %v1339, %v1667
      %v1680 = vadd.f32 %v1340, %v1670
      %1681 = vst.msk [vmem:[#allocation2 + $0x8] sm:$0xff] %vm226, %v1673
      %1682 = vst.msk [vmem:[#allocation2 + $0x10] sm:$0xff] %vm226, %v1674
      %1683 = vst.msk [vmem:[#allocation2 + $0x18] sm:$0xff] %vm226, %v1675
      %1684 = vst.msk [vmem:[#allocation2 + $0x20] sm:$0xff] %vm226, %v1676
      %1685 = vst.msk [vmem:[#allocation2 + $0x28] sm:$0xff] %vm226, %v1677
      %1686 = vst.msk [vmem:[#allocation2 + $0x30] sm:$0xff] %vm226, %v1678
      %1687 = vst.msk [vmem:[#allocation2 + $0x38] sm:$0xff] %vm226, %v1679
      %1688 = vst.msk [vmem:[#allocation2 + $0x40] sm:$0xff] %vm226, %v1680
      %v1689 = vadd.f32 %v1325, %v1643
      %v1690 = vadd.f32 %v1326, %v1646
      %v1691 = vadd.f32 %v1327, %v1651
      %v1692 = vadd.f32 %v1328, %v1654
      %v1693 = vadd.f32 %v1329, %v1659
      %v1694 = vadd.f32 %v1330, %v1662
      %v1695 = vadd.f32 %v1331, %v1667
      %v1696 = vadd.f32 %v1332, %v1670
      %v1697 = vld [vmem:[#allocation2 + $0x8] sm:$0xff]
      %v1698 = vld [vmem:[#allocation2 + $0x10] sm:$0xff]
      %v1699 = vld [vmem:[#allocation2 + $0x18] sm:$0xff]
      %v1700 = vld [vmem:[#allocation2 + $0x20] sm:$0xff]
      %v1701 = vld [vmem:[#allocation2 + $0x28] sm:$0xff]
      %v1702 = vld [vmem:[#allocation2 + $0x30] sm:$0xff]
      %v1703 = vld [vmem:[#allocation2 + $0x38] sm:$0xff]
      %v1704 = vld [vmem:[#allocation2 + $0x40] sm:$0xff]
      %v1705 = vld [vmem:[#allocation2 + $0x6] sm:$0xff]
      %v1706 = vld [vmem:[#allocation2 + $0xe] sm:$0xff]
      %v1707 = vld [vmem:[#allocation2 + $0x16] sm:$0xff]
      %v1708 = vld [vmem:[#allocation2 + $0x1e] sm:$0xff]
      %v1709 = vld [vmem:[#allocation2 + $0x26] sm:$0xff]
      %v1710 = vld [vmem:[#allocation2 + $0x2e] sm:$0xff]
      %v1711 = vld [vmem:[#allocation2 + $0x36] sm:$0xff]
      %v1712 = vld [vmem:[#allocation2 + $0x3e] sm:$0xff]
      %1721 = vrot.lane.b32.xlu0 %v1697, 16
      %v1722 = vpop.permute.xlu0 %1721
      %1723 = vrot.lane.b32.xlu0 %v1698, 16
      %v1724 = vpop.permute.xlu0 %1723
      %1725 = vrot.lane.b32.xlu0 %v1699, 16
      %v1726 = vpop.permute.xlu0 %1725
      %1727 = vrot.lane.b32.xlu0 %v1700, 16
      %v1728 = vpop.permute.xlu0 %1727
      %1729 = vrot.lane.b32.xlu0 %v1701, 16
      %v1730 = vpop.permute.xlu0 %1729
      %1731 = vrot.lane.b32.xlu0 %v1702, 16
      %v1732 = vpop.permute.xlu0 %1731
      %1733 = vrot.lane.b32.xlu0 %v1703, 16
      %v1734 = vpop.permute.xlu0 %1733
      %1735 = vrot.lane.b32.xlu0 %v1704, 16
      %v1736 = vpop.permute.xlu0 %1735
      %v1745 = vsel %vm226, %v1705, %v1722
      %v1746 = vsel %vm226, %v1706, %v1724
      %v1747 = vsel %vm226, %v1707, %v1726
      %v1748 = vsel %vm226, %v1708, %v1728
      %v1749 = vsel %vm226, %v1709, %v1730
      %v1750 = vsel %vm226, %v1710, %v1732
      %v1751 = vsel %vm226, %v1711, %v1734
      %v1752 = vsel %vm226, %v1712, %v1736
      %v1753 = vpack.c.bf16 %v1746, %v1745
      %v1754 = vpack.c.bf16 %v1748, %v1747
      %v1755 = vpack.c.bf16 %v1750, %v1749
      %v1756 = vpack.c.bf16 %v1752, %v1751
      %s1757 = scalar_lea.vmem %s1, 64
      %v1758 = vld [vmem:[%s1757] sm:$0xf]
      %v1759 = vld [vmem:[%s1757 + $0x4] sm:$0xf]
      %v1760 = vld [vmem:[%s1757 + $0x8] sm:$0xf]
      %v1761 = vld [vmem:[%s1757 + $0xc] sm:$0xf]
      %s1762 = scalar_lea.vmem %s2, 4
      %v1763 = vld [vmem:[%s1762] sm:$0x1]
      %v1765 = vlaneseq
      %v1766 = vshrl.u32 %v1765, 7
      %v1767 = vsub.s32 0, %v1766
      %v1768 = vrot.slane %v1763, %v1767
      %v1774 = vunpack.c.l.b16 %v1758
      %v1775 = vunpack.c.l.b16 %v1759
      %v1776 = vunpack.c.l.b16 %v1760
      %v1777 = vunpack.c.l.b16 %v1761
      %v1778 = vpack.c.b16 %v1775, %v1774
      %v1779 = vpack.c.b16 %v1777, %v1776
      %v1783 = vsel %vm327, %v1753, 0
      %v1786 = vsel %vm327, %v1754, 0
      %v1789 = vsel %vm327, %v1755, 0
      %v1792 = vsel %vm327, %v1756, 0
      %1794 = vmatprep.subr.bf16.mxu0 0
      %1795 = vmatpush1.bf16.msra.mxu0 %v1778
      %1796 = vmatprep.subr.bf16.mxu0 0
      %1797 = vmatpush1.bf16.msra.mxu0 %v1779
      %1798 = vmatprep.subr.bf16.mxu0 0
      %1799 = vmatpush1.bf16.msra.mxu0 0
      %1800 = vmatprep.subr.bf16.mxu0 0
      %1801 = vmatpush1.bf16.msra.mxu0 0
      %1802 = vmatprep.subr.bf16.mxu0 0
      %1803 = vmatpush1.bf16.msra.mxu0 0
      %1804 = vmatprep.subr.bf16.mxu0 0
      %1805 = vmatpush1.bf16.msra.mxu0 0
      %1806 = vmatprep.subr.bf16.mxu0 0
      %1807 = vmatpush1.bf16.msra.mxu0 0
      %1808 = vmatprep.subr.bf16.mxu0 0
      %1809 = vmatpush1.bf16.msra.mxu0 0
      %1810 = vmatprep.subr.bf16.mxu0 0
      %1811 = vmatpush1.bf16.msra.mxu0 0
      %1812 = vmatprep.subr.bf16.mxu0 0
      %1813 = vmatpush1.bf16.msra.mxu0 0
      %1814 = vmatprep.subr.bf16.mxu0 0
      %1815 = vmatpush1.bf16.msra.mxu0 0
      %1816 = vmatprep.subr.bf16.mxu0 0
      %1817 = vmatpush1.bf16.msra.mxu0 0
      %1818 = vmatprep.subr.bf16.mxu0 0
      %1819 = vmatpush1.bf16.msra.mxu0 0
      %1820 = vmatprep.subr.bf16.mxu0 0
      %1821 = vmatpush1.bf16.msra.mxu0 0
      %1822 = vmatprep.subr.bf16.mxu0 0
      %1823 = vmatpush1.bf16.msra.mxu0 0
      %1824 = vmatprep.subr.bf16.mxu0 0
      %1825 = vmatpush1.bf16.msra.mxu0 0
      %1826 = vmatprep.mubr.bf16.mxu0 0
      %1827 = vmatmul.mubr.bf16.gmra.mrb[0].mxu0 %v1783
      %v1828 = vpop.f32.mrb[0].mxu0
      %v1829 = vadd.f32 %v1768, %v1828
      %v1830 = vpop.f32.mrb[0].mxu0
      %v1831 = vpop.f32.mrb[0].mxu0
      %v1832 = vadd.f32 %v1768, %v1831
      %v1833 = vpop.f32.mrb[0].mxu0
      %1834 = vmatprep.mubr.bf16.mxu0 0
      %1835 = vmatmul.mubr.bf16.gmra.mrb[0].mxu0 %v1786
      %v1836 = vpop.f32.mrb[0].mxu0
      %v1837 = vadd.f32 %v1768, %v1836
      %v1838 = vpop.f32.mrb[0].mxu0
      %v1839 = vpop.f32.mrb[0].mxu0
      %v1840 = vadd.f32 %v1768, %v1839
      %v1841 = vpop.f32.mrb[0].mxu0
      %1842 = vmatprep.mubr.bf16.mxu0 0
      %1843 = vmatmul.mubr.bf16.gmra.mrb[0].mxu0 %v1789
      %v1844 = vpop.f32.mrb[0].mxu0
      %v1845 = vadd.f32 %v1768, %v1844
      %v1846 = vpop.f32.mrb[0].mxu0
      %v1847 = vpop.f32.mrb[0].mxu0
      %v1848 = vadd.f32 %v1768, %v1847
      %v1849 = vpop.f32.mrb[0].mxu0
      %1850 = vmatprep.mubr.bf16.mxu0 0
      %1851 = vmatmul.mubr.bf16.gmra.mrb[0].mxu0 %v1792
      %v1852 = vpop.f32.mrb[0].mxu0
      %v1853 = vadd.f32 %v1768, %v1852
      %v1854 = vpop.f32.mrb[0].mxu0
      %v1855 = vpop.f32.mrb[0].mxu0
      %v1856 = vadd.f32 %v1768, %v1855
      %v1857 = vpop.f32.mrb[0].mxu0
      %1858 = vdwg.mxu0
      %v1859 = vtanh.pop %v1829
      %v1860 = vtanh.pop %v1832
      %v1861 = vtanh.pop %v1837
      %v1862 = vtanh.pop %v1840
      %v1863 = vtanh.pop %v1845
      %v1864 = vtanh.pop %v1848
      %v1865 = vtanh.pop %v1853
      %v1866 = vtanh.pop %v1856
      %v1867 = vmul.f32 %v1829, 0.5
      %v1868 = vmul.f32 %v1832, 0.5
      %v1869 = vmul.f32 %v1837, 0.5
      %v1870 = vmul.f32 %v1840, 0.5
      %v1871 = vmul.f32 %v1845, 0.5
      %v1872 = vmul.f32 %v1848, 0.5
      %v1873 = vmul.f32 %v1853, 0.5
      %v1874 = vmul.f32 %v1856, 0.5
      %v1875 = vtanh.pop %v1867
      %v1876 = vtanh.pop %v1868
      %v1877 = vtanh.pop %v1869
      %v1878 = vtanh.pop %v1870
      %v1879 = vtanh.pop %v1871
      %v1880 = vtanh.pop %v1872
      %v1881 = vtanh.pop %v1873
      %v1882 = vtanh.pop %v1874
      %v1883 = vadd.f32 %v1875, 1.0
      %v1884 = vadd.f32 %v1876, 1.0
      %v1885 = vadd.f32 %v1877, 1.0
      %v1886 = vadd.f32 %v1878, 1.0
      %v1887 = vadd.f32 %v1879, 1.0
      %v1888 = vadd.f32 %v1880, 1.0
      %v1889 = vadd.f32 %v1881, 1.0
      %v1890 = vadd.f32 %v1882, 1.0
      %v1891 = vmul.f32 %v1883, 0.5
      %v1892 = vmul.f32 %v1884, 0.5
      %v1893 = vmul.f32 %v1885, 0.5
      %v1894 = vmul.f32 %v1886, 0.5
      %v1895 = vmul.f32 %v1887, 0.5
      %v1896 = vmul.f32 %v1888, 0.5
      %v1897 = vmul.f32 %v1889, 0.5
      %v1898 = vmul.f32 %v1890, 0.5
      %1907 = vrot.lane.b32.xlu0 %v1891, 112
      %v1908 = vpop.permute.xlu0 %1907
      %1909 = vrot.lane.b32.xlu0 %v1892, 112
      %v1910 = vpop.permute.xlu0 %1909
      %1911 = vrot.lane.b32.xlu0 %v1893, 112
      %v1912 = vpop.permute.xlu0 %1911
      %1913 = vrot.lane.b32.xlu0 %v1894, 112
      %v1914 = vpop.permute.xlu0 %1913
      %1915 = vrot.lane.b32.xlu0 %v1895, 112
      %v1916 = vpop.permute.xlu0 %1915
      %1917 = vrot.lane.b32.xlu0 %v1896, 112
      %v1918 = vpop.permute.xlu0 %1917
      %1919 = vrot.lane.b32.xlu0 %v1897, 112
      %v1920 = vpop.permute.xlu0 %1919
      %1921 = vrot.lane.b32.xlu0 %v1898, 112
      %v1922 = vpop.permute.xlu0 %1921
      %v1931 = vmul.f32 %v1859, %v1908
      %v1932 = vmul.f32 %v1860, %v1910
      %v1933 = vmul.f32 %v1861, %v1912
      %v1934 = vmul.f32 %v1862, %v1914
      %v1935 = vmul.f32 %v1863, %v1916
      %v1936 = vmul.f32 %v1864, %v1918
      %v1937 = vmul.f32 %v1865, %v1920
      %v1938 = vmul.f32 %v1866, %v1922
      %v1939 = vpack.c.bf16 %v1932, %v1931
      %v1940 = vpack.c.bf16 %v1934, %v1933
      %v1941 = vpack.c.bf16 %v1936, %v1935
      %v1942 = vpack.c.bf16 %v1938, %v1937
      %s1943 = scalar_lea.vmem %s3, 32
      %v1944 = vld [vmem:[%s1943] sm:$0xf]
      %v1945 = vld [vmem:[%s1943 + $0x4] sm:$0xf]
      %s1946 = scalar_lea.vmem %s4, 4
      %v1947 = vld [vmem:[%s1946] sm:$0x1]
      %v1949 = vlaneseq
      %v1950 = vshrl.u32 %v1949, 7
      %v1951 = vsub.s32 0, %v1950
      %v1952 = vrot.slane %v1947, %v1951
      %v1956 = vunpack.c.l.b16 %v1944
      %v1957 = vunpack.c.l.b16 %v1945
      %v1958 = vpack.c.b16 %v1957, %v1956
      %v1961 = vsel %vm226, %v1939, 0
      %v1964 = vsel %vm226, %v1940, 0
      %v1967 = vsel %vm226, %v1941, 0
      %v1970 = vsel %vm226, %v1942, 0
      %1972 = vmatprep.subr.bf16.mxu0 0
      %1973 = vmatpush1.bf16.msra.mxu0 %v1958
      %1974 = vmatprep.subr.bf16.mxu0 0
      %1975 = vmatpush1.bf16.msra.mxu0 0
      %1976 = vmatprep.subr.bf16.mxu0 0
      %1977 = vmatpush1.bf16.msra.mxu0 0
      %1978 = vmatprep.subr.bf16.mxu0 0
      %1979 = vmatpush1.bf16.msra.mxu0 0
      %1980 = vmatprep.subr.bf16.mxu0 0
      %1981 = vmatpush1.bf16.msra.mxu0 0
      %1982 = vmatprep.subr.bf16.mxu0 0
      %1983 = vmatpush1.bf16.msra.mxu0 0
      %1984 = vmatprep.subr.bf16.mxu0 0
      %1985 = vmatpush1.bf16.msra.mxu0 0
      %1986 = vmatprep.subr.bf16.mxu0 0
      %1987 = vmatpush1.bf16.msra.mxu0 0
      %1988 = vmatprep.subr.bf16.mxu0 0
      %1989 = vmatpush1.bf16.msra.mxu0 0
      %1990 = vmatprep.subr.bf16.mxu0 0
      %1991 = vmatpush1.bf16.msra.mxu0 0
      %1992 = vmatprep.subr.bf16.mxu0 0
      %1993 = vmatpush1.bf16.msra.mxu0 0
      %1994 = vmatprep.subr.bf16.mxu0 0
      %1995 = vmatpush1.bf16.msra.mxu0 0
      %1996 = vmatprep.subr.bf16.mxu0 0
      %1997 = vmatpush1.bf16.msra.mxu0 0
      %1998 = vmatprep.subr.bf16.mxu0 0
      %1999 = vmatpush1.bf16.msra.mxu0 0
      %2000 = vmatprep.subr.bf16.mxu0 0
      %2001 = vmatpush1.bf16.msra.mxu0 0
      %2002 = vmatprep.subr.bf16.mxu0 0
      %2003 = vmatpush1.bf16.msra.mxu0 0
      %2004 = vmatprep.mubr.bf16.mxu0 0
      %2005 = vmatmul.mubr.bf16.gmra.mrb[0].mxu0 %v1961
      %v2006 = vpop.f32.mrb[0].mxu0
      %v2007 = vadd.f32 %v1952, %v2006
      %v2008 = vpop.f32.mrb[0].mxu0
      %v2009 = vpop.f32.mrb[0].mxu0
      %v2010 = vadd.f32 %v1952, %v2009
      %v2011 = vpop.f32.mrb[0].mxu0
      %2012 = vmatprep.mubr.bf16.mxu0 0
      %2013 = vmatmul.mubr.bf16.gmra.mrb[0].mxu0 %v1964
      %v2014 = vpop.f32.mrb[0].mxu0
      %v2015 = vadd.f32 %v1952, %v2014
      %v2016 = vpop.f32.mrb[0].mxu0
      %v2017 = vpop.f32.mrb[0].mxu0
      %v2018 = vadd.f32 %v1952, %v2017
      %v2019 = vpop.f32.mrb[0].mxu0
      %2020 = vmatprep.mubr.bf16.mxu0 0
      %2021 = vmatmul.mubr.bf16.gmra.mrb[0].mxu0 %v1967
      %v2022 = vpop.f32.mrb[0].mxu0
      %v2023 = vadd.f32 %v1952, %v2022
      %v2024 = vpop.f32.mrb[0].mxu0
      %v2025 = vpop.f32.mrb[0].mxu0
      %v2026 = vadd.f32 %v1952, %v2025
      %v2027 = vpop.f32.mrb[0].mxu0
      %2028 = vmatprep.mubr.bf16.mxu0 0
      %2029 = vmatmul.mubr.bf16.gmra.mrb[0].mxu0 %v1970
      %v2030 = vpop.f32.mrb[0].mxu0
      %v2031 = vadd.f32 %v1952, %v2030
      %v2032 = vpop.f32.mrb[0].mxu0
      %v2033 = vpop.f32.mrb[0].mxu0
      %v2034 = vadd.f32 %v1952, %v2033
      %v2035 = vpop.f32.mrb[0].mxu0
      %2036 = vdwg.mxu0
      %v2037 = vadd.f32 %v1697, %v2007
      %v2038 = vadd.f32 %v1698, %v2010
      %v2039 = vadd.f32 %v1699, %v2015
      %v2040 = vadd.f32 %v1700, %v2018
      %v2041 = vadd.f32 %v1701, %v2023
      %v2042 = vadd.f32 %v1702, %v2026
      %v2043 = vadd.f32 %v1703, %v2031
      %v2044 = vadd.f32 %v1704, %v2034
      %2045 = vst.msk [vmem:[#allocation2 + $0x8] sm:$0xff] %vm226, %v2037
      %2046 = vst.msk [vmem:[#allocation2 + $0x10] sm:$0xff] %vm226, %v2038
      %2047 = vst.msk [vmem:[#allocation2 + $0x18] sm:$0xff] %vm226, %v2039
      %2048 = vst.msk [vmem:[#allocation2 + $0x20] sm:$0xff] %vm226, %v2040
      %2049 = vst.msk [vmem:[#allocation2 + $0x28] sm:$0xff] %vm226, %v2041
      %2050 = vst.msk [vmem:[#allocation2 + $0x30] sm:$0xff] %vm226, %v2042
      %2051 = vst.msk [vmem:[#allocation2 + $0x38] sm:$0xff] %vm226, %v2043
      %2052 = vst.msk [vmem:[#allocation2 + $0x40] sm:$0xff] %vm226, %v2044
      %v2053 = vadd.f32 %v1689, %v2007
      %v2054 = vadd.f32 %v1690, %v2010
      %v2055 = vadd.f32 %v1691, %v2015
      %v2056 = vadd.f32 %v1692, %v2018
      %v2057 = vadd.f32 %v1693, %v2023
      %v2058 = vadd.f32 %v1694, %v2026
      %v2059 = vadd.f32 %v1695, %v2031
      %v2060 = vadd.f32 %v1696, %v2034
      %v2061 = vld [vmem:[#allocation2 + $0x8] sm:$0xff]
      %v2062 = vld [vmem:[#allocation2 + $0x10] sm:$0xff]
      %v2063 = vld [vmem:[#allocation2 + $0x18] sm:$0xff]
      %v2064 = vld [vmem:[#allocation2 + $0x20] sm:$0xff]
      %v2065 = vld [vmem:[#allocation2 + $0x28] sm:$0xff]
      %v2066 = vld [vmem:[#allocation2 + $0x30] sm:$0xff]
      %v2067 = vld [vmem:[#allocation2 + $0x38] sm:$0xff]
      %v2068 = vld [vmem:[#allocation2 + $0x40] sm:$0xff]
      %v2069 = vld [vmem:[#allocation2 + $0x4] sm:$0xff]
      %v2070 = vld [vmem:[#allocation2 + $0xc] sm:$0xff]
      %v2071 = vld [vmem:[#allocation2 + $0x14] sm:$0xff]
      %v2072 = vld [vmem:[#allocation2 + $0x1c] sm:$0xff]
      %v2073 = vld [vmem:[#allocation2 + $0x24] sm:$0xff]
      %v2074 = vld [vmem:[#allocation2 + $0x2c] sm:$0xff]
      %v2075 = vld [vmem:[#allocation2 + $0x34] sm:$0xff]
      %v2076 = vld [vmem:[#allocation2 + $0x3c] sm:$0xff]
      %2085 = vrot.lane.b32.xlu0 %v2061, 16
      %v2086 = vpop.permute.xlu0 %2085
      %2087 = vrot.lane.b32.xlu0 %v2062, 16
      %v2088 = vpop.permute.xlu0 %2087
      %2089 = vrot.lane.b32.xlu0 %v2063, 16
      %v2090 = vpop.permute.xlu0 %2089
      %2091 = vrot.lane.b32.xlu0 %v2064, 16
      %v2092 = vpop.permute.xlu0 %2091
      %2093 = vrot.lane.b32.xlu0 %v2065, 16
      %v2094 = vpop.permute.xlu0 %2093
      %2095 = vrot.lane.b32.xlu0 %v2066, 16
      %v2096 = vpop.permute.xlu0 %2095
      %2097 = vrot.lane.b32.xlu0 %v2067, 16
      %v2098 = vpop.permute.xlu0 %2097
      %2099 = vrot.lane.b32.xlu0 %v2068, 16
      %v2100 = vpop.permute.xlu0 %2099
      %v2109 = vsel %vm226, %v2069, %v2086
      %v2110 = vsel %vm226, %v2070, %v2088
      %v2111 = vsel %vm226, %v2071, %v2090
      %v2112 = vsel %vm226, %v2072, %v2092
      %v2113 = vsel %vm226, %v2073, %v2094
      %v2114 = vsel %vm226, %v2074, %v2096
      %v2115 = vsel %vm226, %v2075, %v2098
      %v2116 = vsel %vm226, %v2076, %v2100
      %v2117 = vpack.c.bf16 %v2110, %v2109
      %v2118 = vpack.c.bf16 %v2112, %v2111
      %v2119 = vpack.c.bf16 %v2114, %v2113
      %v2120 = vpack.c.bf16 %v2116, %v2115
      %s2121 = scalar_lea.vmem %s1, 80
      %v2122 = vld [vmem:[%s2121] sm:$0xf]
      %v2123 = vld [vmem:[%s2121 + $0x4] sm:$0xf]
      %v2124 = vld [vmem:[%s2121 + $0x8] sm:$0xf]
      %v2125 = vld [vmem:[%s2121 + $0xc] sm:$0xf]
      %s2126 = scalar_lea.vmem %s2, 5
      %v2127 = vld [vmem:[%s2126] sm:$0x1]
      %v2129 = vlaneseq
      %v2130 = vshrl.u32 %v2129, 7
      %v2131 = vsub.s32 0, %v2130
      %v2132 = vrot.slane %v2127, %v2131
      %v2138 = vunpack.c.l.b16 %v2122
      %v2139 = vunpack.c.l.b16 %v2123
      %v2140 = vunpack.c.l.b16 %v2124
      %v2141 = vunpack.c.l.b16 %v2125
      %v2142 = vpack.c.b16 %v2139, %v2138
      %v2143 = vpack.c.b16 %v2141, %v2140
      %v2147 = vsel %vm327, %v2117, 0
      %v2150 = vsel %vm327, %v2118, 0
      %v2153 = vsel %vm327, %v2119, 0
      %v2156 = vsel %vm327, %v2120, 0
      %2158 = vmatprep.subr.bf16.mxu0 0
      %2159 = vmatpush1.bf16.msra.mxu0 %v2142
      %2160 = vmatprep.subr.bf16.mxu0 0
      %2161 = vmatpush1.bf16.msra.mxu0 %v2143
      %2162 = vmatprep.subr.bf16.mxu0 0
      %2163 = vmatpush1.bf16.msra.mxu0 0
      %2164 = vmatprep.subr.bf16.mxu0 0
      %2165 = vmatpush1.bf16.msra.mxu0 0
      %2166 = vmatprep.subr.bf16.mxu0 0
      %2167 = vmatpush1.bf16.msra.mxu0 0
      %2168 = vmatprep.subr.bf16.mxu0 0
      %2169 = vmatpush1.bf16.msra.mxu0 0
      %2170 = vmatprep.subr.bf16.mxu0 0
      %2171 = vmatpush1.bf16.msra.mxu0 0
      %2172 = vmatprep.subr.bf16.mxu0 0
      %2173 = vmatpush1.bf16.msra.mxu0 0
      %2174 = vmatprep.subr.bf16.mxu0 0
      %2175 = vmatpush1.bf16.msra.mxu0 0
      %2176 = vmatprep.subr.bf16.mxu0 0
      %2177 = vmatpush1.bf16.msra.mxu0 0
      %2178 = vmatprep.subr.bf16.mxu0 0
      %2179 = vmatpush1.bf16.msra.mxu0 0
      %2180 = vmatprep.subr.bf16.mxu0 0
      %2181 = vmatpush1.bf16.msra.mxu0 0
      %2182 = vmatprep.subr.bf16.mxu0 0
      %2183 = vmatpush1.bf16.msra.mxu0 0
      %2184 = vmatprep.subr.bf16.mxu0 0
      %2185 = vmatpush1.bf16.msra.mxu0 0
      %2186 = vmatprep.subr.bf16.mxu0 0
      %2187 = vmatpush1.bf16.msra.mxu0 0
      %2188 = vmatprep.subr.bf16.mxu0 0
      %2189 = vmatpush1.bf16.msra.mxu0 0
      %2190 = vmatprep.mubr.bf16.mxu0 0
      %2191 = vmatmul.mubr.bf16.gmra.mrb[0].mxu0 %v2147
      %v2192 = vpop.f32.mrb[0].mxu0
      %v2193 = vadd.f32 %v2132, %v2192
      %v2194 = vpop.f32.mrb[0].mxu0
      %v2195 = vpop.f32.mrb[0].mxu0
      %v2196 = vadd.f32 %v2132, %v2195
      %v2197 = vpop.f32.mrb[0].mxu0
      %2198 = vmatprep.mubr.bf16.mxu0 0
      %2199 = vmatmul.mubr.bf16.gmra.mrb[0].mxu0 %v2150
      %v2200 = vpop.f32.mrb[0].mxu0
      %v2201 = vadd.f32 %v2132, %v2200
      %v2202 = vpop.f32.mrb[0].mxu0
      %v2203 = vpop.f32.mrb[0].mxu0
      %v2204 = vadd.f32 %v2132, %v2203
      %v2205 = vpop.f32.mrb[0].mxu0
      %2206 = vmatprep.mubr.bf16.mxu0 0
      %2207 = vmatmul.mubr.bf16.gmra.mrb[0].mxu0 %v2153
      %v2208 = vpop.f32.mrb[0].mxu0
      %v2209 = vadd.f32 %v2132, %v2208
      %v2210 = vpop.f32.mrb[0].mxu0
      %v2211 = vpop.f32.mrb[0].mxu0
      %v2212 = vadd.f32 %v2132, %v2211
      %v2213 = vpop.f32.mrb[0].mxu0
      %2214 = vmatprep.mubr.bf16.mxu0 0
      %2215 = vmatmul.mubr.bf16.gmra.mrb[0].mxu0 %v2156
      %v2216 = vpop.f32.mrb[0].mxu0
      %v2217 = vadd.f32 %v2132, %v2216
      %v2218 = vpop.f32.mrb[0].mxu0
      %v2219 = vpop.f32.mrb[0].mxu0
      %v2220 = vadd.f32 %v2132, %v2219
      %v2221 = vpop.f32.mrb[0].mxu0
      %2222 = vdwg.mxu0
      %v2223 = vtanh.pop %v2193
      %v2224 = vtanh.pop %v2196
      %v2225 = vtanh.pop %v2201
      %v2226 = vtanh.pop %v2204
      %v2227 = vtanh.pop %v2209
      %v2228 = vtanh.pop %v2212
      %v2229 = vtanh.pop %v2217
      %v2230 = vtanh.pop %v2220
      %v2231 = vmul.f32 %v2193, 0.5
      %v2232 = vmul.f32 %v2196, 0.5
      %v2233 = vmul.f32 %v2201, 0.5
      %v2234 = vmul.f32 %v2204, 0.5
      %v2235 = vmul.f32 %v2209, 0.5
      %v2236 = vmul.f32 %v2212, 0.5
      %v2237 = vmul.f32 %v2217, 0.5
      %v2238 = vmul.f32 %v2220, 0.5
      %v2239 = vtanh.pop %v2231
      %v2240 = vtanh.pop %v2232
      %v2241 = vtanh.pop %v2233
      %v2242 = vtanh.pop %v2234
      %v2243 = vtanh.pop %v2235
      %v2244 = vtanh.pop %v2236
      %v2245 = vtanh.pop %v2237
      %v2246 = vtanh.pop %v2238
      %v2247 = vadd.f32 %v2239, 1.0
      %v2248 = vadd.f32 %v2240, 1.0
      %v2249 = vadd.f32 %v2241, 1.0
      %v2250 = vadd.f32 %v2242, 1.0
      %v2251 = vadd.f32 %v2243, 1.0
      %v2252 = vadd.f32 %v2244, 1.0
      %v2253 = vadd.f32 %v2245, 1.0
      %v2254 = vadd.f32 %v2246, 1.0
      %v2255 = vmul.f32 %v2247, 0.5
      %v2256 = vmul.f32 %v2248, 0.5
      %v2257 = vmul.f32 %v2249, 0.5
      %v2258 = vmul.f32 %v2250, 0.5
      %v2259 = vmul.f32 %v2251, 0.5
      %v2260 = vmul.f32 %v2252, 0.5
      %v2261 = vmul.f32 %v2253, 0.5
      %v2262 = vmul.f32 %v2254, 0.5
      %2271 = vrot.lane.b32.xlu0 %v2255, 112
      %v2272 = vpop.permute.xlu0 %2271
      %2273 = vrot.lane.b32.xlu0 %v2256, 112
      %v2274 = vpop.permute.xlu0 %2273
      %2275 = vrot.lane.b32.xlu0 %v2257, 112
      %v2276 = vpop.permute.xlu0 %2275
      %2277 = vrot.lane.b32.xlu0 %v2258, 112
      %v2278 = vpop.permute.xlu0 %2277
      %2279 = vrot.lane.b32.xlu0 %v2259, 112
      %v2280 = vpop.permute.xlu0 %2279
      %2281 = vrot.lane.b32.xlu0 %v2260, 112
      %v2282 = vpop.permute.xlu0 %2281
      %2283 = vrot.lane.b32.xlu0 %v2261, 112
      %v2284 = vpop.permute.xlu0 %2283
      %2285 = vrot.lane.b32.xlu0 %v2262, 112
      %v2286 = vpop.permute.xlu0 %2285
      %v2295 = vmul.f32 %v2223, %v2272
      %v2296 = vmul.f32 %v2224, %v2274
      %v2297 = vmul.f32 %v2225, %v2276
      %v2298 = vmul.f32 %v2226, %v2278
      %v2299 = vmul.f32 %v2227, %v2280
      %v2300 = vmul.f32 %v2228, %v2282
      %v2301 = vmul.f32 %v2229, %v2284
      %v2302 = vmul.f32 %v2230, %v2286
      %v2303 = vpack.c.bf16 %v2296, %v2295
      %v2304 = vpack.c.bf16 %v2298, %v2297
      %v2305 = vpack.c.bf16 %v2300, %v2299
      %v2306 = vpack.c.bf16 %v2302, %v2301
      %s2307 = scalar_lea.vmem %s3, 40
      %v2308 = vld [vmem:[%s2307] sm:$0xf]
      %v2309 = vld [vmem:[%s2307 + $0x4] sm:$0xf]
      %s2310 = scalar_lea.vmem %s4, 5
      %v2311 = vld [vmem:[%s2310] sm:$0x1]
      %v2313 = vlaneseq
      %v2314 = vshrl.u32 %v2313, 7
      %v2315 = vsub.s32 0, %v2314
      %v2316 = vrot.slane %v2311, %v2315
      %v2320 = vunpack.c.l.b16 %v2308
      %v2321 = vunpack.c.l.b16 %v2309
      %v2322 = vpack.c.b16 %v2321, %v2320
      %v2325 = vsel %vm226, %v2303, 0
      %v2328 = vsel %vm226, %v2304, 0
      %v2331 = vsel %vm226, %v2305, 0
      %v2334 = vsel %vm226, %v2306, 0
      %2336 = vmatprep.subr.bf16.mxu0 0
      %2337 = vmatpush1.bf16.msra.mxu0 %v2322
      %2338 = vmatprep.subr.bf16.mxu0 0
      %2339 = vmatpush1.bf16.msra.mxu0 0
      %2340 = vmatprep.subr.bf16.mxu0 0
      %2341 = vmatpush1.bf16.msra.mxu0 0
      %2342 = vmatprep.subr.bf16.mxu0 0
      %2343 = vmatpush1.bf16.msra.mxu0 0
      %2344 = vmatprep.subr.bf16.mxu0 0
      %2345 = vmatpush1.bf16.msra.mxu0 0
      %2346 = vmatprep.subr.bf16.mxu0 0
      %2347 = vmatpush1.bf16.msra.mxu0 0
      %2348 = vmatprep.subr.bf16.mxu0 0
      %2349 = vmatpush1.bf16.msra.mxu0 0
      %2350 = vmatprep.subr.bf16.mxu0 0
      %2351 = vmatpush1.bf16.msra.mxu0 0
      %2352 = vmatprep.subr.bf16.mxu0 0
      %2353 = vmatpush1.bf16.msra.mxu0 0
      %2354 = vmatprep.subr.bf16.mxu0 0
      %2355 = vmatpush1.bf16.msra.mxu0 0
      %2356 = vmatprep.subr.bf16.mxu0 0
      %2357 = vmatpush1.bf16.msra.mxu0 0
      %2358 = vmatprep.subr.bf16.mxu0 0
      %2359 = vmatpush1.bf16.msra.mxu0 0
      %2360 = vmatprep.subr.bf16.mxu0 0
      %2361 = vmatpush1.bf16.msra.mxu0 0
      %2362 = vmatprep.subr.bf16.mxu0 0
      %2363 = vmatpush1.bf16.msra.mxu0 0
      %2364 = vmatprep.subr.bf16.mxu0 0
      %2365 = vmatpush1.bf16.msra.mxu0 0
      %2366 = vmatprep.subr.bf16.mxu0 0
      %2367 = vmatpush1.bf16.msra.mxu0 0
      %2368 = vmatprep.mubr.bf16.mxu0 0
      %2369 = vmatmul.mubr.bf16.gmra.mrb[0].mxu0 %v2325
      %v2370 = vpop.f32.mrb[0].mxu0
      %v2371 = vadd.f32 %v2316, %v2370
      %v2372 = vpop.f32.mrb[0].mxu0
      %v2373 = vpop.f32.mrb[0].mxu0
      %v2374 = vadd.f32 %v2316, %v2373
      %v2375 = vpop.f32.mrb[0].mxu0
      %2376 = vmatprep.mubr.bf16.mxu0 0
      %2377 = vmatmul.mubr.bf16.gmra.mrb[0].mxu0 %v2328
      %v2378 = vpop.f32.mrb[0].mxu0
      %v2379 = vadd.f32 %v2316, %v2378
      %v2380 = vpop.f32.mrb[0].mxu0
      %v2381 = vpop.f32.mrb[0].mxu0
      %v2382 = vadd.f32 %v2316, %v2381
      %v2383 = vpop.f32.mrb[0].mxu0
      %2384 = vmatprep.mubr.bf16.mxu0 0
      %2385 = vmatmul.mubr.bf16.gmra.mrb[0].mxu0 %v2331
      %v2386 = vpop.f32.mrb[0].mxu0
      %v2387 = vadd.f32 %v2316, %v2386
      %v2388 = vpop.f32.mrb[0].mxu0
      %v2389 = vpop.f32.mrb[0].mxu0
      %v2390 = vadd.f32 %v2316, %v2389
      %v2391 = vpop.f32.mrb[0].mxu0
      %2392 = vmatprep.mubr.bf16.mxu0 0
      %2393 = vmatmul.mubr.bf16.gmra.mrb[0].mxu0 %v2334
      %v2394 = vpop.f32.mrb[0].mxu0
      %v2395 = vadd.f32 %v2316, %v2394
      %v2396 = vpop.f32.mrb[0].mxu0
      %v2397 = vpop.f32.mrb[0].mxu0
      %v2398 = vadd.f32 %v2316, %v2397
      %v2399 = vpop.f32.mrb[0].mxu0
      %2400 = vdwg.mxu0
      %v2401 = vadd.f32 %v2061, %v2371
      %v2402 = vadd.f32 %v2062, %v2374
      %v2403 = vadd.f32 %v2063, %v2379
      %v2404 = vadd.f32 %v2064, %v2382
      %v2405 = vadd.f32 %v2065, %v2387
      %v2406 = vadd.f32 %v2066, %v2390
      %v2407 = vadd.f32 %v2067, %v2395
      %v2408 = vadd.f32 %v2068, %v2398
      %2409 = vst.msk [vmem:[#allocation2 + $0x8] sm:$0xff] %vm226, %v2401
      %2410 = vst.msk [vmem:[#allocation2 + $0x10] sm:$0xff] %vm226, %v2402
      %2411 = vst.msk [vmem:[#allocation2 + $0x18] sm:$0xff] %vm226, %v2403
      %2412 = vst.msk [vmem:[#allocation2 + $0x20] sm:$0xff] %vm226, %v2404
      %2413 = vst.msk [vmem:[#allocation2 + $0x28] sm:$0xff] %vm226, %v2405
      %2414 = vst.msk [vmem:[#allocation2 + $0x30] sm:$0xff] %vm226, %v2406
      %2415 = vst.msk [vmem:[#allocation2 + $0x38] sm:$0xff] %vm226, %v2407
      %2416 = vst.msk [vmem:[#allocation2 + $0x40] sm:$0xff] %vm226, %v2408
      %v2417 = vadd.f32 %v2053, %v2371
      %v2418 = vadd.f32 %v2054, %v2374
      %v2419 = vadd.f32 %v2055, %v2379
      %v2420 = vadd.f32 %v2056, %v2382
      %v2421 = vadd.f32 %v2057, %v2387
      %v2422 = vadd.f32 %v2058, %v2390
      %v2423 = vadd.f32 %v2059, %v2395
      %v2424 = vadd.f32 %v2060, %v2398
      %2433 = vrot.lane.b32.xlu0 %v2417, 112
      %v2434 = vpop.permute.xlu0 %2433
      %2435 = vrot.lane.b32.xlu0 %v2418, 112
      %v2436 = vpop.permute.xlu0 %2435
      %2437 = vrot.lane.b32.xlu0 %v2419, 112
      %v2438 = vpop.permute.xlu0 %2437
      %2439 = vrot.lane.b32.xlu0 %v2420, 112
      %v2440 = vpop.permute.xlu0 %2439
      %2441 = vrot.lane.b32.xlu0 %v2421, 112
      %v2442 = vpop.permute.xlu0 %2441
      %2443 = vrot.lane.b32.xlu0 %v2422, 112
      %v2444 = vpop.permute.xlu0 %2443
      %2445 = vrot.lane.b32.xlu0 %v2423, 112
      %v2446 = vpop.permute.xlu0 %2445
      %2447 = vrot.lane.b32.xlu0 %v2424, 112
      %v2448 = vpop.permute.xlu0 %2447
      %2457 = vst.msk [vmem:[%s224] sm:$0xff] %vm327, %v2434
      %2458 = vst.msk [vmem:[%s224 + $0x8] sm:$0xff] %vm327, %v2436
      %2459 = vst.msk [vmem:[%s224 + $0x10] sm:$0xff] %vm327, %v2438
      %2460 = vst.msk [vmem:[%s224 + $0x18] sm:$0xff] %vm327, %v2440
      %2461 = vst.msk [vmem:[%s224 + $0x20] sm:$0xff] %vm327, %v2442
      %2462 = vst.msk [vmem:[%s224 + $0x28] sm:$0xff] %vm327, %v2444
      %2463 = vst.msk [vmem:[%s224 + $0x30] sm:$0xff] %vm327, %v2446
      %2464 = vst.msk [vmem:[%s224 + $0x38] sm:$0xff] %vm327, %v2448
      %p2465 = scmp.lt.s32.totalorder %s16, 1
      %s2466 = scalar_select %p2465, %s16, 1
      %s2467 = smul.addr %s2466, 8
      %s2468 = smul.addr %s2467, 8
      %s2469 = scalar_lea.vmem %s5, %s2468
      // Predicated region
      $region41: #{tpu_custom_call.1} parent=39 // pred_check
        %p2470 = pneg %p144
      $region42: #{tpu_custom_call.1} parent=39 // pred_check_branch
        %2472 = sbr.rel (%p2470) target = $region44
      $region43: #{tpu_custom_call.1} parent=39 // pred_region
        _
      $region44: #{tpu_custom_call.1} parent=39 // pred_fallthru
        _
    $region40: #{tpu_custom_call.1} parent=5 // pred_fallthru
      _
    %p2473 = scmp.le.s32.totalorder 2, %s11
    // Predicated region
    $region45: #{tpu_custom_call.1} parent=5 // pred_check
      %p2474 = pneg %p2473
    $region46: #{tpu_custom_call.1} parent=5 // pred_check_branch
      %2476 = sbr.rel (%p2474) target = $region48
    $region47: #{tpu_custom_call.1} parent=5 // pred_region
      %s2477 = ssub.s32 %s11, 2
      // Predicated region
      $region49: #{tpu_custom_call.1} parent=47 // pred_check
        %p2478 = pneg %p150
      $region50: #{tpu_custom_call.1} parent=47 // pred_check_branch
        %2480 = sbr.rel (%p2478) target = $region52
      $region51: #{tpu_custom_call.1} parent=47 // pred_region
        %p2481 = scmp.lt.s32.totalorder %s17, 1
        %s2482 = scalar_select %p2481, %s17, 1
        %s2483 = smul.addr %s2482, 8
        %s2484 = smul.addr %s2483, 8
        %s2485 = scalar_lea.vmem %s5, %s2484
      $region52: #{tpu_custom_call.1} parent=47 // pred_fallthru
        _
    $region48: #{tpu_custom_call.1} parent=5 // pred_fallthru
      _
  $region6: #{tpu_custom_call.1} parent=0 // loop_footer
    %s15 = sadd.s32 1, %s11
  $region7: #{tpu_custom_call.1} parent=0 // loop_footer_branch
    %10 = sbr.rel target = $region3
  $region8: #{tpu_custom_call.1} parent=0 // loop_exit
    _

</llo_original>
